<compile_context>
chip_gen: v7x
topology: tpu7x:2x2x1
jax: 0.10.0
libtpu: 0.0.40
codegen_flags: <defaults>
</compile_context>

<pallas_src>
import functools
import math

import jax
import jax.numpy as jnp
from jax import lax
from jax.experimental import pallas as pl
from jax.experimental.pallas import tpu as pltpu


def critic_lstm_kernel(emb_ref, enc_ref, w_ih0_ref, w_hh0_ref, b0_ref,
                       w_rest_ref, b_rest_ref, w_v_ref, b_v_ref, out_ref,
                       *, seq_len, num_layers):
    """Multi-layer LSTM over the whole sequence + value head, one invocation.

    emb_ref    : (T*B, H)        time-major embedded inputs, flattened over (t, b)
    enc_ref    : (B, H)          encoder output -> initial h for every layer (c0 = 0)
    w_ih0_ref  : (H, 4H)         layer-0 input weights (PyTorch gate order i,f,g,o)
    w_hh0_ref  : (H, 4H)         layer-0 recurrent weights
    b0_ref     : (1, 4H)         layer-0 pre-summed bias (b_ih + b_hh)
    w_rest_ref : (max(L-1,1), 2H, 4H)  fused [W_ih; W_hh]^T for layers 1..L-1
    b_rest_ref : (max(L-1,1), 1, 4H)   pre-summed biases for layers 1..L-1
    w_v_ref    : (1, H)          value-head weight row
    b_v_ref    : (1, 1)          value-head bias
    out_ref    : (B, 1)          value(final top-layer hidden)
    """
    T = seq_len
    L = num_layers
    B, H = enc_ref.shape
    H4 = 4 * H

    enc = enc_ref[...]
    hs = [enc for _ in range(L)]
    cs = [jnp.zeros((B, H), jnp.float32) for _ in range(L)]

    # ---- hoisted, outside the recurrence ------------------------------------
    # Layer-0 input projection for ALL time steps: one MXU push, bias folded in.
    x0_all = (jnp.dot(emb_ref[...], w_ih0_ref[...],
                      preferred_element_type=jnp.float32)
              + b0_ref[...])                                     # (T*B, 4H)

    # Per-layer weight/bias loads and bias broadcasts, loaded once.
    w_hh0 = w_hh0_ref[...]                                       # (H, 4H)
    w_rest = [w_rest_ref[l] for l in range(L - 1)]               # (2H, 4H) each
    b_rest = [jnp.broadcast_to(b_rest_ref[l], (B, H4)) for l in range(L - 1)]

    # Gate-activation constants: sigmoid(x) = 0.5*tanh(x/2) + 0.5, so pre-scale
    # i/f/o lanes by 0.5 (g lanes by 1.0), one tanh, then fix up non-g lanes.
    lane = lax.broadcasted_iota(jnp.int32, (B, H4), 1)
    is_g = (lane >= 2 * H) & (lane < 3 * H)
    pre_scale = jnp.where(is_g, jnp.float32(1.0), jnp.float32(0.5))

    def gate_act(gates):
        t = jnp.tanh(gates * pre_scale)                          # single EUP pass
        return jnp.where(is_g, t, 0.5 * t + 0.5)

    def cell_update(l, act):
        i_g = act[:, 0:H]
        f_g = act[:, H:2 * H]
        g_g = act[:, 2 * H:3 * H]
        o_g = act[:, 3 * H:4 * H]
        c_new = f_g * cs[l] + i_g * g_g
        h_new = o_g * jnp.tanh(c_new)
        cs[l] = c_new
        hs[l] = h_new
        return h_new

    # ---- recurrence: T and L are small & static -> straight-line unroll -----
    for t in range(T):
        # Layer 0: input projection precomputed, only h @ W_hh on the serial path.
        gates = x0_all[t * B:(t + 1) * B] + jnp.dot(
            hs[0], w_hh0, preferred_element_type=jnp.float32)
        x = cell_update(0, gate_act(gates))
        for l in range(1, L):
            xh = jnp.concatenate([x, hs[l]], axis=-1)            # (B, 2H)
            gates = (jnp.dot(xh, w_rest[l - 1],
                             preferred_element_type=jnp.float32)
                     + b_rest[l - 1])
            x = cell_update(l, gate_act(gates))

    # ---- fused value head (B,H) -> (B,1): VPU mul + lane reduce + bias -------
    h_top = hs[L - 1]
    val = jnp.sum(h_top * jnp.broadcast_to(w_v_ref[...], (B, H)),
                  axis=-1, keepdims=True) + b_v_ref[...]
    out_ref[...] = val


def prepare_critic_params(w_ih_t, w_hh_t, b_ih, b_hh, w_v_t, b_v):
    """One-time parameter fusion, kept out of the per-call path."""
    L, H, H4 = w_ih_t.shape
    w_ih0 = w_ih_t[0].astype(jnp.float32)                        # (H, 4H)
    w_hh0 = w_hh_t[0].astype(jnp.float32)                        # (H, 4H)
    b0 = (b_ih[0] + b_hh[0]).astype(jnp.float32)                 # (1, 4H)
    if L > 1:
        w_rest = jnp.concatenate([w_ih_t[1:], w_hh_t[1:]],
                                 axis=1).astype(jnp.float32)     # (L-1, 2H, 4H)
        b_rest = (b_ih[1:] + b_hh[1:]).astype(jnp.float32)       # (L-1, 1, 4H)
    else:
        # Dummy (never read in the kernel when L == 1); avoids zero-sized refs.
        w_rest = jnp.zeros((1, 2 * H, H4), jnp.float32)
        b_rest = jnp.zeros((1, 1, H4), jnp.float32)
    return dict(num_layers=L,
                w_ih0=w_ih0, w_hh0=w_hh0, b0=b0,
                w_rest=w_rest, b_rest=b_rest,
                w_v=w_v_t.T.astype(jnp.float32),                 # (1, H)
                b_v=b_v.astype(jnp.float32))                     # (1, 1)


def critic_forward(tokens, enc, emb_table, params):
    B, max_len = tokens.shape
    assert max_len >= 2, "need at least one LSTM time step (max_len >= 2)"
    T = max_len - 1
    H = emb_table.shape[1]
    H4 = 4 * H
    L = params["num_layers"]

    # Embedding gather emitted directly time-major: (T, B, H) -> flat (T*B, H).
    # TODO(synk): F.dropout(training=True) is stochastic; treated as identity (p=0 / eval mode).
    emb = jnp.take(emb_table, tokens[:, :-1].T, axis=0).astype(jnp.float32)
    emb2d = emb.reshape(T * B, H)

    kernel = functools.partial(critic_lstm_kernel, seq_len=T, num_layers=L)

    value = pl.pallas_call(
        kernel,
        out_shape=jax.ShapeDtypeStruct((B, 1), jnp.float32),
        grid=(1,),
        in_specs=[
            pl.BlockSpec((T * B, H), lambda i: (0, 0)),                   # emb (flat)
            pl.BlockSpec((B, H), lambda i: (0, 0)),                       # enc -> h0
            pl.BlockSpec((H, H4), lambda i: (0, 0)),                      # W_ih layer 0
            pl.BlockSpec((H, H4), lambda i: (0, 0)),                      # W_hh layer 0
            pl.BlockSpec((1, H4), lambda i: (0, 0)),                      # bias layer 0
            pl.BlockSpec(params["w_rest"].shape, lambda i: (0, 0, 0)),    # fused W, l>=1
            pl.BlockSpec(params["b_rest"].shape, lambda i: (0, 0, 0)),    # fused b, l>=1
            pl.BlockSpec((1, H), lambda i: (0, 0)),                       # value weight
            pl.BlockSpec((1, 1), lambda i: (0, 0)),                       # value bias
        ],
        out_specs=pl.BlockSpec((B, 1), lambda i: (0, 0)),
        compiler_params=pltpu.CompilerParams(
            dimension_semantics=("arbitrary",)),
    )(emb2d, enc.astype(jnp.float32),
      params["w_ih0"], params["w_hh0"], params["b0"],
      params["w_rest"], params["b_rest"],
      params["w_v"], params["b_v"])

    return value[:, 0]                                           # .squeeze() -> (B,)


def critic_ref(tokens, enc, emb_table, w_ih_t, w_hh_t, b_ih, b_hh, w_v_t, b_v):
    """Pure-JAX reference of the PyTorch forward pass (dropout as identity)."""
    L, H, _ = w_ih_t.shape
    emb = jnp.take(emb_table, tokens[:, :-1], axis=0)            # (B, T, H)
    T = emb.shape[1]
    h = [enc.astype(jnp.float32) for _ in range(L)]
    c = [jnp.zeros((enc.shape[0], H), jnp.float32) for _ in range(L)]
    for t in range(T):
        x = emb[:, t, :].astype(jnp.float32)
        for l in range(L):
            gates = x @ w_ih_t[l] + h[l] @ w_hh_t[l] + b_ih[l][0] + b_hh[l][0]
            i_g = jax.nn.sigmoid(gates[:, :H])
            f_g = jax.nn.sigmoid(gates[:, H:2 * H])
            g_g = jnp.tanh(gates[:, 2 * H:3 * H])
            o_g = jax.nn.sigmoid(gates[:, 3 * H:])
            c[l] = f_g * c[l] + i_g * g_g
            h[l] = o_g * jnp.tanh(c[l])
            x = h[l]
    return (x @ w_v_t + b_v)[:, 0]


if __name__ == "__main__":
    # Small shapes consistent with the module's forward().
    vocab_size = 50
    dec_hsz = 32          # H
    rnn_layers = 2        # L
    bsz = 8               # B
    max_len = 9           # -> sequence length fed to LSTM = 8
    dropout = 0.0         # dropout treated as identity (deterministic)

    key = jax.random.PRNGKey(0)
    ks = jax.random.split(key, 10)

    stdv_v = 1.0 / math.sqrt(vocab_size)   # embedding / value-weight init in _reset_parameters
    stdv_h = 1.0 / math.sqrt(dec_hsz)      # default PyTorch LSTM / Linear-bias init scale

    emb_table = jax.random.uniform(ks[0], (vocab_size, dec_hsz), jnp.float32, -stdv_v, stdv_v)
    w_ih_t = jax.random.uniform(ks[1], (rnn_layers, dec_hsz, 4 * dec_hsz), jnp.float32, -stdv_h, stdv_h)
    w_hh_t = jax.random.uniform(ks[2], (rnn_layers, dec_hsz, 4 * dec_hsz), jnp.float32, -stdv_h, stdv_h)
    b_ih = jax.random.uniform(ks[3], (rnn_layers, 1, 4 * dec_hsz), jnp.float32, -stdv_h, stdv_h)
    b_hh = jax.random.uniform(ks[4], (rnn_layers, 1, 4 * dec_hsz), jnp.float32, -stdv_h, stdv_h)
    w_v_t = jax.random.uniform(ks[5], (dec_hsz, 1), jnp.float32, -stdv_v, stdv_v)
    b_v = jax.random.uniform(ks[6], (1, 1), jnp.float32, -stdv_h, stdv_h)

    tokens = jax.random.randint(ks[7], (bsz, max_len), 0, vocab_size)   # inputs
    enc = jax.random.normal(ks[8], (bsz, dec_hsz), jnp.float32)         # encoder output for feed_enc

    # One-time parameter fusion (out of the per-call path).
    params = prepare_critic_params(w_ih_t, w_hh_t, b_ih, b_hh, w_v_t, b_v)

    out = critic_forward(tokens, enc, emb_table, params)
    out = jax.block_until_ready(out)

    ref = critic_ref(tokens, enc, emb_table, w_ih_t, w_hh_t, b_ih, b_hh, w_v_t, b_v)
    assert out.shape == (bsz,), out.shape
    assert jnp.allclose(out, ref, atol=1e-4, rtol=1e-4), (out, ref)

    print("KERNEL_OK")
</pallas_src>

<mosaic_0001>
module attributes {stable_mosaic.version = 11 : i64} {
  func.func @critic_lstm_kernel(%arg0: i32, %arg1: memref<64x32xf32, #tpu.memory_space<vmem>>, %arg2: memref<8x32xf32, #tpu.memory_space<vmem>>, %arg3: memref<32x128xf32, #tpu.memory_space<vmem>>, %arg4: memref<32x128xf32, #tpu.memory_space<vmem>>, %arg5: memref<1x128xf32, #tpu.memory_space<vmem>>, %arg6: memref<1x64x128xf32, #tpu.memory_space<vmem>>, %arg7: memref<1x1x128xf32, #tpu.memory_space<vmem>>, %arg8: memref<1x32xf32, #tpu.memory_space<vmem>>, %arg9: memref<1x1xf32, #tpu.memory_space<vmem>>, %arg10: memref<8x1xf32, #tpu.memory_space<vmem>>) attributes {dimension_semantics = [#tpu.dimension_semantics<arbitrary>], iteration_bounds = array<i64: 1>, scalar_prefetch = 0 : i64, scratch_operands = 0 : i64, tpu.core_type = #tpu.core_type<tc>, window_params = [{pipeline_mode = #tpu.pipeline_mode<synchronous>, transform_indices = @transform_0, window_bounds = array<i64: 64, 32>}, {pipeline_mode = #tpu.pipeline_mode<synchronous>, transform_indices = @transform_1, window_bounds = array<i64: 8, 32>}, {pipeline_mode = #tpu.pipeline_mode<synchronous>, transform_indices = @transform_2, window_bounds = array<i64: 32, 128>}, {pipeline_mode = #tpu.pipeline_mode<synchronous>, transform_indices = @transform_3, window_bounds = array<i64: 32, 128>}, {pipeline_mode = #tpu.pipeline_mode<synchronous>, transform_indices = @transform_4, window_bounds = array<i64: 1, 128>}, {pipeline_mode = #tpu.pipeline_mode<synchronous>, transform_indices = @transform_5, window_bounds = array<i64: 1, 64, 128>}, {pipeline_mode = #tpu.pipeline_mode<synchronous>, transform_indices = @transform_6, window_bounds = array<i64: 1, 1, 128>}, {pipeline_mode = #tpu.pipeline_mode<synchronous>, transform_indices = @transform_7, window_bounds = array<i64: 1, 32>}, {pipeline_mode = #tpu.pipeline_mode<synchronous>, transform_indices = @transform_8, window_bounds = array<i64: 1, 1>}, {pipeline_mode = #tpu.pipeline_mode<synchronous>, transform_indices = @transform_9, window_bounds = array<i64: 8, 1>}]} {
    %c0 = arith.constant 0 : index
    %c0_0 = arith.constant 0 : index
    %0 = vector.load %arg2[%c0, %c0_0] : memref<8x32xf32, #tpu.memory_space<vmem>>, vector<8x32xf32>
    %cst = arith.constant 0.000000e+00 : f32
    %1 = vector.broadcast %cst : f32 to vector<8x32xf32>
    %cst_1 = arith.constant 0.000000e+00 : f32
    %2 = vector.broadcast %cst_1 : f32 to vector<8x32xf32>
    %c0_2 = arith.constant 0 : index
    %c0_3 = arith.constant 0 : index
    %3 = vector.load %arg1[%c0_2, %c0_3] : memref<64x32xf32, #tpu.memory_space<vmem>>, vector<64x32xf32>
    %c0_4 = arith.constant 0 : index
    %c0_5 = arith.constant 0 : index
    %4 = vector.load %arg3[%c0_4, %c0_5] : memref<32x128xf32, #tpu.memory_space<vmem>>, vector<32x128xf32>
    %cst_6 = arith.constant dense<0.000000e+00> : vector<64x128xf32>
    %5 = tpu.matmul %3, %4, %cst_6 {dimension_numbers = #tpu.dot_dimension_numbers<[1], [0], [0], [1], [0, 0, 1, 1], [], []>} : vector<64x32xf32>, vector<32x128xf32>, vector<64x128xf32> -> vector<64x128xf32>
    %c0_7 = arith.constant 0 : index
    %c0_8 = arith.constant 0 : index
    %6 = vector.load %arg5[%c0_7, %c0_8] : memref<1x128xf32, #tpu.memory_space<vmem>>, vector<1x128xf32>
    %7 = vector.broadcast %6 : vector<1x128xf32> to vector<64x128xf32>
    %8 = arith.addf %5, %7 : vector<64x128xf32>
    %c0_9 = arith.constant 0 : index
    %c0_10 = arith.constant 0 : index
    %9 = vector.load %arg4[%c0_9, %c0_10] : memref<32x128xf32, #tpu.memory_space<vmem>>, vector<32x128xf32>
    %c0_11 = arith.constant 0 : index
    %c0_12 = arith.constant 0 : index
    %c0_13 = arith.constant 0 : index
    %10 = vector.load %arg6[%c0_11, %c0_12, %c0_13] : memref<1x64x128xf32, #tpu.memory_space<vmem>>, vector<1x64x128xf32>
    %11 = vector.shape_cast %10 : vector<1x64x128xf32> to vector<64x128xf32>
    %c0_14 = arith.constant 0 : index
    %c0_15 = arith.constant 0 : index
    %c0_16 = arith.constant 0 : index
    %12 = vector.load %arg7[%c0_14, %c0_15, %c0_16] : memref<1x1x128xf32, #tpu.memory_space<vmem>>, vector<1x1x128xf32>
    %13 = vector.shape_cast %12 : vector<1x1x128xf32> to vector<1x128xf32>
    %14 = vector.shape_cast %13 : vector<1x128xf32> to vector<1x128xf32>
    %15 = vector.broadcast %14 : vector<1x128xf32> to vector<8x128xf32>
    %16 = tpu.iota {dimensions = array<i32: 1>} : vector<8x128xi32>
    %c64_i32 = arith.constant 64 : i32
    %17 = vector.broadcast %c64_i32 : i32 to vector<8x128xi32>
    %18 = arith.cmpi sge, %16, %17 : vector<8x128xi32>
    %c96_i32 = arith.constant 96 : i32
    %19 = vector.broadcast %c96_i32 : i32 to vector<8x128xi32>
    %20 = arith.cmpi slt, %16, %19 : vector<8x128xi32>
    %21 = arith.andi %18, %20 : vector<8x128xi1>
    %cst_17 = arith.constant 1.000000e+00 : f32
    %cst_18 = arith.constant 5.000000e-01 : f32
    %22 = vector.broadcast %cst_17 : f32 to vector<8x128xf32>
    %23 = vector.broadcast %cst_18 : f32 to vector<8x128xf32>
    %24 = arith.select %21, %22, %23 : vector<8x128xi1>, vector<8x128xf32>
    %25 = vector.extract_strided_slice %8 {offsets = [0, 0], sizes = [8, 128], strides = [1, 1]} : vector<64x128xf32> to vector<8x128xf32>
    %cst_19 = arith.constant dense<0.000000e+00> : vector<8x128xf32>
    %26 = tpu.matmul %0, %9, %cst_19 {dimension_numbers = #tpu.dot_dimension_numbers<[1], [0], [0], [1], [0, 0, 1, 1], [], []>} : vector<8x32xf32>, vector<32x128xf32>, vector<8x128xf32> -> vector<8x128xf32>
    %27 = arith.addf %25, %26 : vector<8x128xf32>
    %28 = arith.mulf %27, %24 : vector<8x128xf32>
    %29 = math.tanh %28 : vector<8x128xf32>
    %cst_20 = arith.constant 5.000000e-01 : f32
    %30 = vector.broadcast %cst_20 : f32 to vector<8x128xf32>
    %31 = arith.mulf %30, %29 : vector<8x128xf32>
    %cst_21 = arith.constant 5.000000e-01 : f32
    %32 = vector.broadcast %cst_21 : f32 to vector<8x128xf32>
    %33 = arith.addf %31, %32 : vector<8x128xf32>
    %34 = arith.select %21, %29, %33 : vector<8x128xi1>, vector<8x128xf32>
    %35 = vector.extract_strided_slice %34 {offsets = [0, 0], sizes = [8, 32], strides = [1, 1]} : vector<8x128xf32> to vector<8x32xf32>
    %36 = vector.extract_strided_slice %34 {offsets = [0, 32], sizes = [8, 32], strides = [1, 1]} : vector<8x128xf32> to vector<8x32xf32>
    %37 = vector.extract_strided_slice %34 {offsets = [0, 64], sizes = [8, 32], strides = [1, 1]} : vector<8x128xf32> to vector<8x32xf32>
    %38 = vector.extract_strided_slice %34 {offsets = [0, 96], sizes = [8, 32], strides = [1, 1]} : vector<8x128xf32> to vector<8x32xf32>
    %39 = arith.mulf %36, %1 : vector<8x32xf32>
    %40 = arith.mulf %35, %37 : vector<8x32xf32>
    %41 = arith.addf %39, %40 : vector<8x32xf32>
    %42 = math.tanh %41 : vector<8x32xf32>
    %43 = arith.mulf %38, %42 : vector<8x32xf32>
    %44 = tpu.concatenate %43, %0 in 1 : vector<8x32xf32>, vector<8x32xf32> -> vector<8x64xf32>
    %cst_22 = arith.constant dense<0.000000e+00> : vector<8x128xf32>
    %45 = tpu.matmul %44, %11, %cst_22 {dimension_numbers = #tpu.dot_dimension_numbers<[1], [0], [0], [1], [0, 0, 1, 1], [], []>} : vector<8x64xf32>, vector<64x128xf32>, vector<8x128xf32> -> vector<8x128xf32>
    %46 = arith.addf %45, %15 : vector<8x128xf32>
    %47 = arith.mulf %46, %24 : vector<8x128xf32>
    %48 = math.tanh %47 : vector<8x128xf32>
    %cst_23 = arith.constant 5.000000e-01 : f32
    %49 = vector.broadcast %cst_23 : f32 to vector<8x128xf32>
    %50 = arith.mulf %49, %48 : vector<8x128xf32>
    %cst_24 = arith.constant 5.000000e-01 : f32
    %51 = vector.broadcast %cst_24 : f32 to vector<8x128xf32>
    %52 = arith.addf %50, %51 : vector<8x128xf32>
    %53 = arith.select %21, %48, %52 : vector<8x128xi1>, vector<8x128xf32>
    %54 = vector.extract_strided_slice %53 {offsets = [0, 0], sizes = [8, 32], strides = [1, 1]} : vector<8x128xf32> to vector<8x32xf32>
    %55 = vector.extract_strided_slice %53 {offsets = [0, 32], sizes = [8, 32], strides = [1, 1]} : vector<8x128xf32> to vector<8x32xf32>
    %56 = vector.extract_strided_slice %53 {offsets = [0, 64], sizes = [8, 32], strides = [1, 1]} : vector<8x128xf32> to vector<8x32xf32>
    %57 = vector.extract_strided_slice %53 {offsets = [0, 96], sizes = [8, 32], strides = [1, 1]} : vector<8x128xf32> to vector<8x32xf32>
    %58 = arith.mulf %55, %2 : vector<8x32xf32>
    %59 = arith.mulf %54, %56 : vector<8x32xf32>
    %60 = arith.addf %58, %59 : vector<8x32xf32>
    %61 = math.tanh %60 : vector<8x32xf32>
    %62 = arith.mulf %57, %61 : vector<8x32xf32>
    %63 = vector.extract_strided_slice %8 {offsets = [8, 0], sizes = [8, 128], strides = [1, 1]} : vector<64x128xf32> to vector<8x128xf32>
    %cst_25 = arith.constant dense<0.000000e+00> : vector<8x128xf32>
    %64 = tpu.matmul %43, %9, %cst_25 {dimension_numbers = #tpu.dot_dimension_numbers<[1], [0], [0], [1], [0, 0, 1, 1], [], []>} : vector<8x32xf32>, vector<32x128xf32>, vector<8x128xf32> -> vector<8x128xf32>
    %65 = arith.addf %63, %64 : vector<8x128xf32>
    %66 = arith.mulf %65, %24 : vector<8x128xf32>
    %67 = math.tanh %66 : vector<8x128xf32>
    %cst_26 = arith.constant 5.000000e-01 : f32
    %68 = vector.broadcast %cst_26 : f32 to vector<8x128xf32>
    %69 = arith.mulf %68, %67 : vector<8x128xf32>
    %cst_27 = arith.constant 5.000000e-01 : f32
    %70 = vector.broadcast %cst_27 : f32 to vector<8x128xf32>
    %71 = arith.addf %69, %70 : vector<8x128xf32>
    %72 = arith.select %21, %67, %71 : vector<8x128xi1>, vector<8x128xf32>
    %73 = vector.extract_strided_slice %72 {offsets = [0, 0], sizes = [8, 32], strides = [1, 1]} : vector<8x128xf32> to vector<8x32xf32>
    %74 = vector.extract_strided_slice %72 {offsets = [0, 32], sizes = [8, 32], strides = [1, 1]} : vector<8x128xf32> to vector<8x32xf32>
    %75 = vector.extract_strided_slice %72 {offsets = [0, 64], sizes = [8, 32], strides = [1, 1]} : vector<8x128xf32> to vector<8x32xf32>
    %76 = vector.extract_strided_slice %72 {offsets = [0, 96], sizes = [8, 32], strides = [1, 1]} : vector<8x128xf32> to vector<8x32xf32>
    %77 = arith.mulf %74, %41 : vector<8x32xf32>
    %78 = arith.mulf %73, %75 : vector<8x32xf32>
    %79 = arith.addf %77, %78 : vector<8x32xf32>
    %80 = math.tanh %79 : vector<8x32xf32>
    %81 = arith.mulf %76, %80 : vector<8x32xf32>
    %82 = tpu.concatenate %81, %62 in 1 : vector<8x32xf32>, vector<8x32xf32> -> vector<8x64xf32>
    %cst_28 = arith.constant dense<0.000000e+00> : vector<8x128xf32>
    %83 = tpu.matmul %82, %11, %cst_28 {dimension_numbers = #tpu.dot_dimension_numbers<[1], [0], [0], [1], [0, 0, 1, 1], [], []>} : vector<8x64xf32>, vector<64x128xf32>, vector<8x128xf32> -> vector<8x128xf32>
    %84 = arith.addf %83, %15 : vector<8x128xf32>
    %85 = arith.mulf %84, %24 : vector<8x128xf32>
    %86 = math.tanh %85 : vector<8x128xf32>
    %cst_29 = arith.constant 5.000000e-01 : f32
    %87 = vector.broadcast %cst_29 : f32 to vector<8x128xf32>
    %88 = arith.mulf %87, %86 : vector<8x128xf32>
    %cst_30 = arith.constant 5.000000e-01 : f32
    %89 = vector.broadcast %cst_30 : f32 to vector<8x128xf32>
    %90 = arith.addf %88, %89 : vector<8x128xf32>
    %91 = arith.select %21, %86, %90 : vector<8x128xi1>, vector<8x128xf32>
    %92 = vector.extract_strided_slice %91 {offsets = [0, 0], sizes = [8, 32], strides = [1, 1]} : vector<8x128xf32> to vector<8x32xf32>
    %93 = vector.extract_strided_slice %91 {offsets = [0, 32], sizes = [8, 32], strides = [1, 1]} : vector<8x128xf32> to vector<8x32xf32>
    %94 = vector.extract_strided_slice %91 {offsets = [0, 64], sizes = [8, 32], strides = [1, 1]} : vector<8x128xf32> to vector<8x32xf32>
    %95 = vector.extract_strided_slice %91 {offsets = [0, 96], sizes = [8, 32], strides = [1, 1]} : vector<8x128xf32> to vector<8x32xf32>
    %96 = arith.mulf %93, %60 : vector<8x32xf32>
    %97 = arith.mulf %92, %94 : vector<8x32xf32>
    %98 = arith.addf %96, %97 : vector<8x32xf32>
    %99 = math.tanh %98 : vector<8x32xf32>
    %100 = arith.mulf %95, %99 : vector<8x32xf32>
    %101 = vector.extract_strided_slice %8 {offsets = [16, 0], sizes = [8, 128], strides = [1, 1]} : vector<64x128xf32> to vector<8x128xf32>
    %cst_31 = arith.constant dense<0.000000e+00> : vector<8x128xf32>
    %102 = tpu.matmul %81, %9, %cst_31 {dimension_numbers = #tpu.dot_dimension_numbers<[1], [0], [0], [1], [0, 0, 1, 1], [], []>} : vector<8x32xf32>, vector<32x128xf32>, vector<8x128xf32> -> vector<8x128xf32>
    %103 = arith.addf %101, %102 : vector<8x128xf32>
    %104 = arith.mulf %103, %24 : vector<8x128xf32>
    %105 = math.tanh %104 : vector<8x128xf32>
    %cst_32 = arith.constant 5.000000e-01 : f32
    %106 = vector.broadcast %cst_32 : f32 to vector<8x128xf32>
    %107 = arith.mulf %106, %105 : vector<8x128xf32>
    %cst_33 = arith.constant 5.000000e-01 : f32
    %108 = vector.broadcast %cst_33 : f32 to vector<8x128xf32>
    %109 = arith.addf %107, %108 : vector<8x128xf32>
    %110 = arith.select %21, %105, %109 : vector<8x128xi1>, vector<8x128xf32>
    %111 = vector.extract_strided_slice %110 {offsets = [0, 0], sizes = [8, 32], strides = [1, 1]} : vector<8x128xf32> to vector<8x32xf32>
    %112 = vector.extract_strided_slice %110 {offsets = [0, 32], sizes = [8, 32], strides = [1, 1]} : vector<8x128xf32> to vector<8x32xf32>
    %113 = vector.extract_strided_slice %110 {offsets = [0, 64], sizes = [8, 32], strides = [1, 1]} : vector<8x128xf32> to vector<8x32xf32>
    %114 = vector.extract_strided_slice %110 {offsets = [0, 96], sizes = [8, 32], strides = [1, 1]} : vector<8x128xf32> to vector<8x32xf32>
    %115 = arith.mulf %112, %79 : vector<8x32xf32>
    %116 = arith.mulf %111, %113 : vector<8x32xf32>
    %117 = arith.addf %115, %116 : vector<8x32xf32>
    %118 = math.tanh %117 : vector<8x32xf32>
    %119 = arith.mulf %114, %118 : vector<8x32xf32>
    %120 = tpu.concatenate %119, %100 in 1 : vector<8x32xf32>, vector<8x32xf32> -> vector<8x64xf32>
    %cst_34 = arith.constant dense<0.000000e+00> : vector<8x128xf32>
    %121 = tpu.matmul %120, %11, %cst_34 {dimension_numbers = #tpu.dot_dimension_numbers<[1], [0], [0], [1], [0, 0, 1, 1], [], []>} : vector<8x64xf32>, vector<64x128xf32>, vector<8x128xf32> -> vector<8x128xf32>
    %122 = arith.addf %121, %15 : vector<8x128xf32>
    %123 = arith.mulf %122, %24 : vector<8x128xf32>
    %124 = math.tanh %123 : vector<8x128xf32>
    %cst_35 = arith.constant 5.000000e-01 : f32
    %125 = vector.broadcast %cst_35 : f32 to vector<8x128xf32>
    %126 = arith.mulf %125, %124 : vector<8x128xf32>
    %cst_36 = arith.constant 5.000000e-01 : f32
    %127 = vector.broadcast %cst_36 : f32 to vector<8x128xf32>
    %128 = arith.addf %126, %127 : vector<8x128xf32>
    %129 = arith.select %21, %124, %128 : vector<8x128xi1>, vector<8x128xf32>
    %130 = vector.extract_strided_slice %129 {offsets = [0, 0], sizes = [8, 32], strides = [1, 1]} : vector<8x128xf32> to vector<8x32xf32>
    %131 = vector.extract_strided_slice %129 {offsets = [0, 32], sizes = [8, 32], strides = [1, 1]} : vector<8x128xf32> to vector<8x32xf32>
    %132 = vector.extract_strided_slice %129 {offsets = [0, 64], sizes = [8, 32], strides = [1, 1]} : vector<8x128xf32> to vector<8x32xf32>
    %133 = vector.extract_strided_slice %129 {offsets = [0, 96], sizes = [8, 32], strides = [1, 1]} : vector<8x128xf32> to vector<8x32xf32>
    %134 = arith.mulf %131, %98 : vector<8x32xf32>
    %135 = arith.mulf %130, %132 : vector<8x32xf32>
    %136 = arith.addf %134, %135 : vector<8x32xf32>
    %137 = math.tanh %136 : vector<8x32xf32>
    %138 = arith.mulf %133, %137 : vector<8x32xf32>
    %139 = vector.extract_strided_slice %8 {offsets = [24, 0], sizes = [8, 128], strides = [1, 1]} : vector<64x128xf32> to vector<8x128xf32>
    %cst_37 = arith.constant dense<0.000000e+00> : vector<8x128xf32>
    %140 = tpu.matmul %119, %9, %cst_37 {dimension_numbers = #tpu.dot_dimension_numbers<[1], [0], [0], [1], [0, 0, 1, 1], [], []>} : vector<8x32xf32>, vector<32x128xf32>, vector<8x128xf32> -> vector<8x128xf32>
    %141 = arith.addf %139, %140 : vector<8x128xf32>
    %142 = arith.mulf %141, %24 : vector<8x128xf32>
    %143 = math.tanh %142 : vector<8x128xf32>
    %cst_38 = arith.constant 5.000000e-01 : f32
    %144 = vector.broadcast %cst_38 : f32 to vector<8x128xf32>
    %145 = arith.mulf %144, %143 : vector<8x128xf32>
    %cst_39 = arith.constant 5.000000e-01 : f32
    %146 = vector.broadcast %cst_39 : f32 to vector<8x128xf32>
    %147 = arith.addf %145, %146 : vector<8x128xf32>
    %148 = arith.select %21, %143, %147 : vector<8x128xi1>, vector<8x128xf32>
    %149 = vector.extract_strided_slice %148 {offsets = [0, 0], sizes = [8, 32], strides = [1, 1]} : vector<8x128xf32> to vector<8x32xf32>
    %150 = vector.extract_strided_slice %148 {offsets = [0, 32], sizes = [8, 32], strides = [1, 1]} : vector<8x128xf32> to vector<8x32xf32>
    %151 = vector.extract_strided_slice %148 {offsets = [0, 64], sizes = [8, 32], strides = [1, 1]} : vector<8x128xf32> to vector<8x32xf32>
    %152 = vector.extract_strided_slice %148 {offsets = [0, 96], sizes = [8, 32], strides = [1, 1]} : vector<8x128xf32> to vector<8x32xf32>
    %153 = arith.mulf %150, %117 : vector<8x32xf32>
    %154 = arith.mulf %149, %151 : vector<8x32xf32>
    %155 = arith.addf %153, %154 : vector<8x32xf32>
    %156 = math.tanh %155 : vector<8x32xf32>
    %157 = arith.mulf %152, %156 : vector<8x32xf32>
    %158 = tpu.concatenate %157, %138 in 1 : vector<8x32xf32>, vector<8x32xf32> -> vector<8x64xf32>
    %cst_40 = arith.constant dense<0.000000e+00> : vector<8x128xf32>
    %159 = tpu.matmul %158, %11, %cst_40 {dimension_numbers = #tpu.dot_dimension_numbers<[1], [0], [0], [1], [0, 0, 1, 1], [], []>} : vector<8x64xf32>, vector<64x128xf32>, vector<8x128xf32> -> vector<8x128xf32>
    %160 = arith.addf %159, %15 : vector<8x128xf32>
    %161 = arith.mulf %160, %24 : vector<8x128xf32>
    %162 = math.tanh %161 : vector<8x128xf32>
    %cst_41 = arith.constant 5.000000e-01 : f32
    %163 = vector.broadcast %cst_41 : f32 to vector<8x128xf32>
    %164 = arith.mulf %163, %162 : vector<8x128xf32>
    %cst_42 = arith.constant 5.000000e-01 : f32
    %165 = vector.broadcast %cst_42 : f32 to vector<8x128xf32>
    %166 = arith.addf %164, %165 : vector<8x128xf32>
    %167 = arith.select %21, %162, %166 : vector<8x128xi1>, vector<8x128xf32>
    %168 = vector.extract_strided_slice %167 {offsets = [0, 0], sizes = [8, 32], strides = [1, 1]} : vector<8x128xf32> to vector<8x32xf32>
    %169 = vector.extract_strided_slice %167 {offsets = [0, 32], sizes = [8, 32], strides = [1, 1]} : vector<8x128xf32> to vector<8x32xf32>
    %170 = vector.extract_strided_slice %167 {offsets = [0, 64], sizes = [8, 32], strides = [1, 1]} : vector<8x128xf32> to vector<8x32xf32>
    %171 = vector.extract_strided_slice %167 {offsets = [0, 96], sizes = [8, 32], strides = [1, 1]} : vector<8x128xf32> to vector<8x32xf32>
    %172 = arith.mulf %169, %136 : vector<8x32xf32>
    %173 = arith.mulf %168, %170 : vector<8x32xf32>
    %174 = arith.addf %172, %173 : vector<8x32xf32>
    %175 = math.tanh %174 : vector<8x32xf32>
    %176 = arith.mulf %171, %175 : vector<8x32xf32>
    %177 = vector.extract_strided_slice %8 {offsets = [32, 0], sizes = [8, 128], strides = [1, 1]} : vector<64x128xf32> to vector<8x128xf32>
    %cst_43 = arith.constant dense<0.000000e+00> : vector<8x128xf32>
    %178 = tpu.matmul %157, %9, %cst_43 {dimension_numbers = #tpu.dot_dimension_numbers<[1], [0], [0], [1], [0, 0, 1, 1], [], []>} : vector<8x32xf32>, vector<32x128xf32>, vector<8x128xf32> -> vector<8x128xf32>
    %179 = arith.addf %177, %178 : vector<8x128xf32>
    %180 = arith.mulf %179, %24 : vector<8x128xf32>
    %181 = math.tanh %180 : vector<8x128xf32>
    %cst_44 = arith.constant 5.000000e-01 : f32
    %182 = vector.broadcast %cst_44 : f32 to vector<8x128xf32>
    %183 = arith.mulf %182, %181 : vector<8x128xf32>
    %cst_45 = arith.constant 5.000000e-01 : f32
    %184 = vector.broadcast %cst_45 : f32 to vector<8x128xf32>
    %185 = arith.addf %183, %184 : vector<8x128xf32>
    %186 = arith.select %21, %181, %185 : vector<8x128xi1>, vector<8x128xf32>
    %187 = vector.extract_strided_slice %186 {offsets = [0, 0], sizes = [8, 32], strides = [1, 1]} : vector<8x128xf32> to vector<8x32xf32>
    %188 = vector.extract_strided_slice %186 {offsets = [0, 32], sizes = [8, 32], strides = [1, 1]} : vector<8x128xf32> to vector<8x32xf32>
    %189 = vector.extract_strided_slice %186 {offsets = [0, 64], sizes = [8, 32], strides = [1, 1]} : vector<8x128xf32> to vector<8x32xf32>
    %190 = vector.extract_strided_slice %186 {offsets = [0, 96], sizes = [8, 32], strides = [1, 1]} : vector<8x128xf32> to vector<8x32xf32>
    %191 = arith.mulf %188, %155 : vector<8x32xf32>
    %192 = arith.mulf %187, %189 : vector<8x32xf32>
    %193 = arith.addf %191, %192 : vector<8x32xf32>
    %194 = math.tanh %193 : vector<8x32xf32>
    %195 = arith.mulf %190, %194 : vector<8x32xf32>
    %196 = tpu.concatenate %195, %176 in 1 : vector<8x32xf32>, vector<8x32xf32> -> vector<8x64xf32>
    %cst_46 = arith.constant dense<0.000000e+00> : vector<8x128xf32>
    %197 = tpu.matmul %196, %11, %cst_46 {dimension_numbers = #tpu.dot_dimension_numbers<[1], [0], [0], [1], [0, 0, 1, 1], [], []>} : vector<8x64xf32>, vector<64x128xf32>, vector<8x128xf32> -> vector<8x128xf32>
    %198 = arith.addf %197, %15 : vector<8x128xf32>
    %199 = arith.mulf %198, %24 : vector<8x128xf32>
    %200 = math.tanh %199 : vector<8x128xf32>
    %cst_47 = arith.constant 5.000000e-01 : f32
    %201 = vector.broadcast %cst_47 : f32 to vector<8x128xf32>
    %202 = arith.mulf %201, %200 : vector<8x128xf32>
    %cst_48 = arith.constant 5.000000e-01 : f32
    %203 = vector.broadcast %cst_48 : f32 to vector<8x128xf32>
    %204 = arith.addf %202, %203 : vector<8x128xf32>
    %205 = arith.select %21, %200, %204 : vector<8x128xi1>, vector<8x128xf32>
    %206 = vector.extract_strided_slice %205 {offsets = [0, 0], sizes = [8, 32], strides = [1, 1]} : vector<8x128xf32> to vector<8x32xf32>
    %207 = vector.extract_strided_slice %205 {offsets = [0, 32], sizes = [8, 32], strides = [1, 1]} : vector<8x128xf32> to vector<8x32xf32>
    %208 = vector.extract_strided_slice %205 {offsets = [0, 64], sizes = [8, 32], strides = [1, 1]} : vector<8x128xf32> to vector<8x32xf32>
    %209 = vector.extract_strided_slice %205 {offsets = [0, 96], sizes = [8, 32], strides = [1, 1]} : vector<8x128xf32> to vector<8x32xf32>
    %210 = arith.mulf %207, %174 : vector<8x32xf32>
    %211 = arith.mulf %206, %208 : vector<8x32xf32>
    %212 = arith.addf %210, %211 : vector<8x32xf32>
    %213 = math.tanh %212 : vector<8x32xf32>
    %214 = arith.mulf %209, %213 : vector<8x32xf32>
    %215 = vector.extract_strided_slice %8 {offsets = [40, 0], sizes = [8, 128], strides = [1, 1]} : vector<64x128xf32> to vector<8x128xf32>
    %cst_49 = arith.constant dense<0.000000e+00> : vector<8x128xf32>
    %216 = tpu.matmul %195, %9, %cst_49 {dimension_numbers = #tpu.dot_dimension_numbers<[1], [0], [0], [1], [0, 0, 1, 1], [], []>} : vector<8x32xf32>, vector<32x128xf32>, vector<8x128xf32> -> vector<8x128xf32>
    %217 = arith.addf %215, %216 : vector<8x128xf32>
    %218 = arith.mulf %217, %24 : vector<8x128xf32>
    %219 = math.tanh %218 : vector<8x128xf32>
    %cst_50 = arith.constant 5.000000e-01 : f32
    %220 = vector.broadcast %cst_50 : f32 to vector<8x128xf32>
    %221 = arith.mulf %220, %219 : vector<8x128xf32>
    %cst_51 = arith.constant 5.000000e-01 : f32
    %222 = vector.broadcast %cst_51 : f32 to vector<8x128xf32>
    %223 = arith.addf %221, %222 : vector<8x128xf32>
    %224 = arith.select %21, %219, %223 : vector<8x128xi1>, vector<8x128xf32>
    %225 = vector.extract_strided_slice %224 {offsets = [0, 0], sizes = [8, 32], strides = [1, 1]} : vector<8x128xf32> to vector<8x32xf32>
    %226 = vector.extract_strided_slice %224 {offsets = [0, 32], sizes = [8, 32], strides = [1, 1]} : vector<8x128xf32> to vector<8x32xf32>
    %227 = vector.extract_strided_slice %224 {offsets = [0, 64], sizes = [8, 32], strides = [1, 1]} : vector<8x128xf32> to vector<8x32xf32>
    %228 = vector.extract_strided_slice %224 {offsets = [0, 96], sizes = [8, 32], strides = [1, 1]} : vector<8x128xf32> to vector<8x32xf32>
    %229 = arith.mulf %226, %193 : vector<8x32xf32>
    %230 = arith.mulf %225, %227 : vector<8x32xf32>
    %231 = arith.addf %229, %230 : vector<8x32xf32>
    %232 = math.tanh %231 : vector<8x32xf32>
    %233 = arith.mulf %228, %232 : vector<8x32xf32>
    %234 = tpu.concatenate %233, %214 in 1 : vector<8x32xf32>, vector<8x32xf32> -> vector<8x64xf32>
    %cst_52 = arith.constant dense<0.000000e+00> : vector<8x128xf32>
    %235 = tpu.matmul %234, %11, %cst_52 {dimension_numbers = #tpu.dot_dimension_numbers<[1], [0], [0], [1], [0, 0, 1, 1], [], []>} : vector<8x64xf32>, vector<64x128xf32>, vector<8x128xf32> -> vector<8x128xf32>
    %236 = arith.addf %235, %15 : vector<8x128xf32>
    %237 = arith.mulf %236, %24 : vector<8x128xf32>
    %238 = math.tanh %237 : vector<8x128xf32>
    %cst_53 = arith.constant 5.000000e-01 : f32
    %239 = vector.broadcast %cst_53 : f32 to vector<8x128xf32>
    %240 = arith.mulf %239, %238 : vector<8x128xf32>
    %cst_54 = arith.constant 5.000000e-01 : f32
    %241 = vector.broadcast %cst_54 : f32 to vector<8x128xf32>
    %242 = arith.addf %240, %241 : vector<8x128xf32>
    %243 = arith.select %21, %238, %242 : vector<8x128xi1>, vector<8x128xf32>
    %244 = vector.extract_strided_slice %243 {offsets = [0, 0], sizes = [8, 32], strides = [1, 1]} : vector<8x128xf32> to vector<8x32xf32>
    %245 = vector.extract_strided_slice %243 {offsets = [0, 32], sizes = [8, 32], strides = [1, 1]} : vector<8x128xf32> to vector<8x32xf32>
    %246 = vector.extract_strided_slice %243 {offsets = [0, 64], sizes = [8, 32], strides = [1, 1]} : vector<8x128xf32> to vector<8x32xf32>
    %247 = vector.extract_strided_slice %243 {offsets = [0, 96], sizes = [8, 32], strides = [1, 1]} : vector<8x128xf32> to vector<8x32xf32>
    %248 = arith.mulf %245, %212 : vector<8x32xf32>
    %249 = arith.mulf %244, %246 : vector<8x32xf32>
    %250 = arith.addf %248, %249 : vector<8x32xf32>
    %251 = math.tanh %250 : vector<8x32xf32>
    %252 = arith.mulf %247, %251 : vector<8x32xf32>
    %253 = vector.extract_strided_slice %8 {offsets = [48, 0], sizes = [8, 128], strides = [1, 1]} : vector<64x128xf32> to vector<8x128xf32>
    %cst_55 = arith.constant dense<0.000000e+00> : vector<8x128xf32>
    %254 = tpu.matmul %233, %9, %cst_55 {dimension_numbers = #tpu.dot_dimension_numbers<[1], [0], [0], [1], [0, 0, 1, 1], [], []>} : vector<8x32xf32>, vector<32x128xf32>, vector<8x128xf32> -> vector<8x128xf32>
    %255 = arith.addf %253, %254 : vector<8x128xf32>
    %256 = arith.mulf %255, %24 : vector<8x128xf32>
    %257 = math.tanh %256 : vector<8x128xf32>
    %cst_56 = arith.constant 5.000000e-01 : f32
    %258 = vector.broadcast %cst_56 : f32 to vector<8x128xf32>
    %259 = arith.mulf %258, %257 : vector<8x128xf32>
    %cst_57 = arith.constant 5.000000e-01 : f32
    %260 = vector.broadcast %cst_57 : f32 to vector<8x128xf32>
    %261 = arith.addf %259, %260 : vector<8x128xf32>
    %262 = arith.select %21, %257, %261 : vector<8x128xi1>, vector<8x128xf32>
    %263 = vector.extract_strided_slice %262 {offsets = [0, 0], sizes = [8, 32], strides = [1, 1]} : vector<8x128xf32> to vector<8x32xf32>
    %264 = vector.extract_strided_slice %262 {offsets = [0, 32], sizes = [8, 32], strides = [1, 1]} : vector<8x128xf32> to vector<8x32xf32>
    %265 = vector.extract_strided_slice %262 {offsets = [0, 64], sizes = [8, 32], strides = [1, 1]} : vector<8x128xf32> to vector<8x32xf32>
    %266 = vector.extract_strided_slice %262 {offsets = [0, 96], sizes = [8, 32], strides = [1, 1]} : vector<8x128xf32> to vector<8x32xf32>
    %267 = arith.mulf %264, %231 : vector<8x32xf32>
    %268 = arith.mulf %263, %265 : vector<8x32xf32>
    %269 = arith.addf %267, %268 : vector<8x32xf32>
    %270 = math.tanh %269 : vector<8x32xf32>
    %271 = arith.mulf %266, %270 : vector<8x32xf32>
    %272 = tpu.concatenate %271, %252 in 1 : vector<8x32xf32>, vector<8x32xf32> -> vector<8x64xf32>
    %cst_58 = arith.constant dense<0.000000e+00> : vector<8x128xf32>
    %273 = tpu.matmul %272, %11, %cst_58 {dimension_numbers = #tpu.dot_dimension_numbers<[1], [0], [0], [1], [0, 0, 1, 1], [], []>} : vector<8x64xf32>, vector<64x128xf32>, vector<8x128xf32> -> vector<8x128xf32>
    %274 = arith.addf %273, %15 : vector<8x128xf32>
    %275 = arith.mulf %274, %24 : vector<8x128xf32>
    %276 = math.tanh %275 : vector<8x128xf32>
    %cst_59 = arith.constant 5.000000e-01 : f32
    %277 = vector.broadcast %cst_59 : f32 to vector<8x128xf32>
    %278 = arith.mulf %277, %276 : vector<8x128xf32>
    %cst_60 = arith.constant 5.000000e-01 : f32
    %279 = vector.broadcast %cst_60 : f32 to vector<8x128xf32>
    %280 = arith.addf %278, %279 : vector<8x128xf32>
    %281 = arith.select %21, %276, %280 : vector<8x128xi1>, vector<8x128xf32>
    %282 = vector.extract_strided_slice %281 {offsets = [0, 0], sizes = [8, 32], strides = [1, 1]} : vector<8x128xf32> to vector<8x32xf32>
    %283 = vector.extract_strided_slice %281 {offsets = [0, 32], sizes = [8, 32], strides = [1, 1]} : vector<8x128xf32> to vector<8x32xf32>
    %284 = vector.extract_strided_slice %281 {offsets = [0, 64], sizes = [8, 32], strides = [1, 1]} : vector<8x128xf32> to vector<8x32xf32>
    %285 = vector.extract_strided_slice %281 {offsets = [0, 96], sizes = [8, 32], strides = [1, 1]} : vector<8x128xf32> to vector<8x32xf32>
    %286 = arith.mulf %283, %250 : vector<8x32xf32>
    %287 = arith.mulf %282, %284 : vector<8x32xf32>
    %288 = arith.addf %286, %287 : vector<8x32xf32>
    %289 = math.tanh %288 : vector<8x32xf32>
    %290 = arith.mulf %285, %289 : vector<8x32xf32>
    %291 = vector.extract_strided_slice %8 {offsets = [56, 0], sizes = [8, 128], strides = [1, 1]} : vector<64x128xf32> to vector<8x128xf32>
    %cst_61 = arith.constant dense<0.000000e+00> : vector<8x128xf32>
    %292 = tpu.matmul %271, %9, %cst_61 {dimension_numbers = #tpu.dot_dimension_numbers<[1], [0], [0], [1], [0, 0, 1, 1], [], []>} : vector<8x32xf32>, vector<32x128xf32>, vector<8x128xf32> -> vector<8x128xf32>
    %293 = arith.addf %291, %292 : vector<8x128xf32>
    %294 = arith.mulf %293, %24 : vector<8x128xf32>
    %295 = math.tanh %294 : vector<8x128xf32>
    %cst_62 = arith.constant 5.000000e-01 : f32
    %296 = vector.broadcast %cst_62 : f32 to vector<8x128xf32>
    %297 = arith.mulf %296, %295 : vector<8x128xf32>
    %cst_63 = arith.constant 5.000000e-01 : f32
    %298 = vector.broadcast %cst_63 : f32 to vector<8x128xf32>
    %299 = arith.addf %297, %298 : vector<8x128xf32>
    %300 = arith.select %21, %295, %299 : vector<8x128xi1>, vector<8x128xf32>
    %301 = vector.extract_strided_slice %300 {offsets = [0, 0], sizes = [8, 32], strides = [1, 1]} : vector<8x128xf32> to vector<8x32xf32>
    %302 = vector.extract_strided_slice %300 {offsets = [0, 32], sizes = [8, 32], strides = [1, 1]} : vector<8x128xf32> to vector<8x32xf32>
    %303 = vector.extract_strided_slice %300 {offsets = [0, 64], sizes = [8, 32], strides = [1, 1]} : vector<8x128xf32> to vector<8x32xf32>
    %304 = vector.extract_strided_slice %300 {offsets = [0, 96], sizes = [8, 32], strides = [1, 1]} : vector<8x128xf32> to vector<8x32xf32>
    %305 = arith.mulf %302, %269 : vector<8x32xf32>
    %306 = arith.mulf %301, %303 : vector<8x32xf32>
    %307 = arith.addf %305, %306 : vector<8x32xf32>
    %308 = math.tanh %307 : vector<8x32xf32>
    %309 = arith.mulf %304, %308 : vector<8x32xf32>
    %310 = tpu.concatenate %309, %290 in 1 : vector<8x32xf32>, vector<8x32xf32> -> vector<8x64xf32>
    %cst_64 = arith.constant dense<0.000000e+00> : vector<8x128xf32>
    %311 = tpu.matmul %310, %11, %cst_64 {dimension_numbers = #tpu.dot_dimension_numbers<[1], [0], [0], [1], [0, 0, 1, 1], [], []>} : vector<8x64xf32>, vector<64x128xf32>, vector<8x128xf32> -> vector<8x128xf32>
    %312 = arith.addf %311, %15 : vector<8x128xf32>
    %313 = arith.mulf %312, %24 : vector<8x128xf32>
    %314 = math.tanh %313 : vector<8x128xf32>
    %cst_65 = arith.constant 5.000000e-01 : f32
    %315 = vector.broadcast %cst_65 : f32 to vector<8x128xf32>
    %316 = arith.mulf %315, %314 : vector<8x128xf32>
    %cst_66 = arith.constant 5.000000e-01 : f32
    %317 = vector.broadcast %cst_66 : f32 to vector<8x128xf32>
    %318 = arith.addf %316, %317 : vector<8x128xf32>
    %319 = arith.select %21, %314, %318 : vector<8x128xi1>, vector<8x128xf32>
    %320 = vector.extract_strided_slice %319 {offsets = [0, 0], sizes = [8, 32], strides = [1, 1]} : vector<8x128xf32> to vector<8x32xf32>
    %321 = vector.extract_strided_slice %319 {offsets = [0, 32], sizes = [8, 32], strides = [1, 1]} : vector<8x128xf32> to vector<8x32xf32>
    %322 = vector.extract_strided_slice %319 {offsets = [0, 64], sizes = [8, 32], strides = [1, 1]} : vector<8x128xf32> to vector<8x32xf32>
    %323 = vector.extract_strided_slice %319 {offsets = [0, 96], sizes = [8, 32], strides = [1, 1]} : vector<8x128xf32> to vector<8x32xf32>
    %324 = arith.mulf %321, %288 : vector<8x32xf32>
    %325 = arith.mulf %320, %322 : vector<8x32xf32>
    %326 = arith.addf %324, %325 : vector<8x32xf32>
    %327 = math.tanh %326 : vector<8x32xf32>
    %328 = arith.mulf %323, %327 : vector<8x32xf32>
    %c0_67 = arith.constant 0 : index
    %c0_68 = arith.constant 0 : index
    %329 = vector.load %arg8[%c0_67, %c0_68] : memref<1x32xf32, #tpu.memory_space<vmem>>, vector<1x32xf32>
    %330 = vector.shape_cast %329 : vector<1x32xf32> to vector<1x32xf32>
    %331 = vector.broadcast %330 : vector<1x32xf32> to vector<8x32xf32>
    %332 = arith.mulf %328, %331 : vector<8x32xf32>
    %cst_69 = arith.constant dense<0.000000e+00> : vector<8xf32>
    %333 = vector.multi_reduction <add>, %332, %cst_69 [1] : vector<8x32xf32> to vector<8xf32>
    %334 = vector.shape_cast %333 : vector<8xf32> to vector<8x1xf32>
    %c0_70 = arith.constant 0 : index
    %c0_71 = arith.constant 0 : index
    %335 = vector.load %arg9[%c0_70, %c0_71] : memref<1x1xf32, #tpu.memory_space<vmem>>, vector<1x1xf32>
    %336 = vector.broadcast %335 : vector<1x1xf32> to vector<8x1xf32>
    %337 = arith.addf %334, %336 : vector<8x1xf32>
    %c0_72 = arith.constant 0 : index
    %c0_73 = arith.constant 0 : index
    %338 = vector.load %arg10[%c0_72, %c0_73] : memref<8x1xf32, #tpu.memory_space<vmem>>, vector<8x1xf32>
    tpu.vector_store %arg10[%c0_72, %c0_73], %337 {strides = array<i32>} : memref<8x1xf32, #tpu.memory_space<vmem>>, vector<8x1xf32>,
    return
  }
  func.func @transform_0(%arg0: i32) -> (i32, i32) {
    %c0_i32 = arith.constant 0 : i32
    %c0_i32_0 = arith.constant 0 : i32
    %c0_i32_1 = arith.constant 0 : i32
    return %c0_i32, %c0_i32_0 : i32, i32
  }
  func.func @transform_1(%arg0: i32) -> (i32, i32) {
    %c0_i32 = arith.constant 0 : i32
    %c0_i32_0 = arith.constant 0 : i32
    %c0_i32_1 = arith.constant 0 : i32
    return %c0_i32, %c0_i32_0 : i32, i32
  }
  func.func @transform_2(%arg0: i32) -> (i32, i32) {
    %c0_i32 = arith.constant 0 : i32
    %c0_i32_0 = arith.constant 0 : i32
    %c0_i32_1 = arith.constant 0 : i32
    return %c0_i32, %c0_i32_0 : i32, i32
  }
  func.func @transform_3(%arg0: i32) -> (i32, i32) {
    %c0_i32 = arith.constant 0 : i32
    %c0_i32_0 = arith.constant 0 : i32
    %c0_i32_1 = arith.constant 0 : i32
    return %c0_i32, %c0_i32_0 : i32, i32
  }
  func.func @transform_4(%arg0: i32) -> (i32, i32) {
    %c0_i32 = arith.constant 0 : i32
    %c0_i32_0 = arith.constant 0 : i32
    %c0_i32_1 = arith.constant 0 : i32
    return %c0_i32, %c0_i32_0 : i32, i32
  }
  func.func @transform_5(%arg0: i32) -> (i32, i32, i32) {
    %c0_i32 = arith.constant 0 : i32
    %c0_i32_0 = arith.constant 0 : i32
    %c0_i32_1 = arith.constant 0 : i32
    %c0_i32_2 = arith.constant 0 : i32
    return %c0_i32, %c0_i32_0, %c0_i32_1 : i32, i32, i32
  }
  func.func @transform_6(%arg0: i32) -> (i32, i32, i32) {
    %c0_i32 = arith.constant 0 : i32
    %c0_i32_0 = arith.constant 0 : i32
    %c0_i32_1 = arith.constant 0 : i32
    %c0_i32_2 = arith.constant 0 : i32
    return %c0_i32, %c0_i32_0, %c0_i32_1 : i32, i32, i32
  }
  func.func @transform_7(%arg0: i32) -> (i32, i32) {
    %c0_i32 = arith.constant 0 : i32
    %c0_i32_0 = arith.constant 0 : i32
    %c0_i32_1 = arith.constant 0 : i32
    return %c0_i32, %c0_i32_0 : i32, i32
  }
  func.func @transform_8(%arg0: i32) -> (i32, i32) {
    %c0_i32 = arith.constant 0 : i32
    %c0_i32_0 = arith.constant 0 : i32
    %c0_i32_1 = arith.constant 0 : i32
    return %c0_i32, %c0_i32_0 : i32, i32
  }
  func.func @transform_9(%arg0: i32) -> (i32, i32) {
    %c0_i32 = arith.constant 0 : i32
    %c0_i32_0 = arith.constant 0 : i32
    %c0_i32_1 = arith.constant 0 : i32
    return %c0_i32, %c0_i32_0 : i32, i32
  }
}

</mosaic_0001>

<llo_original>
// kernel: tpu_custom_call.1
$region0: #{tpu_custom_call.1}
  #allocation0 [shape = 'u32[]', space=smem, size = 0x4, offset = 0x4, fixed_abs, tag = 'smem constant byte address 0x4 - core index']
  #allocation1 [shape = 'u32[144,128]{1,0:T(1,128)}', space=vmem, size = 0x12000, scoped, tag = 'internal scratch']
  #allocation2 [shape = 'f32[1,1]{1,0:T(1,128)S(1)}', space=vmem, size = 0x200, scoped, tag = 'scoped memory for tpu_custom_call.1']
  %s0 = inlined_call_operand.vmem [shape: f32[64,32], index: 0, kind: input, shape index: {}]
  %s1 = inlined_call_operand.vmem [shape: f32[8,32], index: 1, kind: input, shape index: {}]
  %s2 = inlined_call_operand.vmem [shape: f32[32,128], index: 2, kind: input, shape index: {}]
  %s3 = inlined_call_operand.hbm [shape: f32[32,128], index: 3, kind: input, shape index: {}]
  %s4 = inlined_call_operand.vmem [shape: f32[1,128], index: 4, kind: input, shape index: {}]
  %s5 = inlined_call_operand.vmem [shape: f32[1,64,128], index: 5, kind: input, shape index: {}]
  %s6 = inlined_call_operand.vmem [shape: f32[1,1,128], index: 6, kind: input, shape index: {}]
  %s7 = inlined_call_operand.vmem [shape: f32[1,32], index: 7, kind: input, shape index: {}]
  %s8 = inlined_call_operand.<no memory space> [shape: f32[1,1], index: 8, kind: input, shape index: {}]
  %s9 = inlined_call_operand.vmem [shape: f32[8,1], index: 9, kind: output, shape index: {}]
  %s10 = sld [smem:[#allocation0]]
  $region50: #{tpu_custom_call.1} parent=0
    _
  %s12 = ssub.s32 1, %s10
  %s13 = scalar_select 0, %s12, %s10
  %v14 = vstv %s8
  %15 = vst [vmem:[#allocation2] sm:$0x1] %v14
  $region1: #{tpu_custom_call.1} parent=0
    #allocation3 [shape = 'u8[16384]{0}', space=vmem, size = 0x4000, scoped, tag = 'input window, operand 3, single buffered']
    #allocation4 [shape = 's32[1]{0}', space=sflag, size = 0x4, scoped, tag = 'scoped memory for tpu_custom_call.1']
    %16 = vsyncpa [#allocation4], 0
    // Predicated region
    $region2: #{tpu_custom_call.1} parent=1 // pred_check
      _
    $region3: #{tpu_custom_call.1} parent=1 // pred_check_branch
      %18 = sbr.rel (0) target = $region5
    $region4: #{tpu_custom_call.1} parent=1 // pred_region
      _
    $region5: #{tpu_custom_call.1} parent=1 // pred_fallthru
      _
    // Predicated region
    $region6: #{tpu_custom_call.1} parent=1 // pred_check
      _
    $region7: #{tpu_custom_call.1} parent=1 // pred_check_branch
      %20 = sbr.rel (0) target = $region9
    $region8: #{tpu_custom_call.1} parent=1 // pred_region
      _
    $region9: #{tpu_custom_call.1} parent=1 // pred_fallthru
      _
    // Predicated region
    $region10: #{tpu_custom_call.1} parent=1 // pred_check
      _
    $region11: #{tpu_custom_call.1} parent=1 // pred_check_branch
      %22 = sbr.rel (0) target = $region13
    $region12: #{tpu_custom_call.1} parent=1 // pred_region
      _
    $region13: #{tpu_custom_call.1} parent=1 // pred_fallthru
      _
    // Predicated region
    $region14: #{tpu_custom_call.1} parent=1 // pred_check
      _
    $region15: #{tpu_custom_call.1} parent=1 // pred_check_branch
      %24 = sbr.rel (0) target = $region17
    $region16: #{tpu_custom_call.1} parent=1 // pred_region
      %s26 = ssub.s32 512, 512
      %27 = vsyncadd [#allocation4], %s26
      %s28 = sshll.u32 [#allocation3], 4
      %s29 = int_to_ptr.vmem [resolvable:$true] %s28
      %34 = dma.hbm_to_vmem [thread:$0]  %s3, 512, %s29, [#allocation4], 128, 128, 8
    $region17: #{tpu_custom_call.1} parent=1 // pred_fallthru
      _
    // Predicated region
    $region18: #{tpu_custom_call.1} parent=1 // pred_check
      _
    $region19: #{tpu_custom_call.1} parent=1 // pred_check_branch
      %36 = sbr.rel (0) target = $region21
    $region20: #{tpu_custom_call.1} parent=1 // pred_region
      _
    $region21: #{tpu_custom_call.1} parent=1 // pred_fallthru
      _
    // Predicated region
    $region22: #{tpu_custom_call.1} parent=1 // pred_check
      _
    $region23: #{tpu_custom_call.1} parent=1 // pred_check_branch
      %38 = sbr.rel (0) target = $region25
    $region24: #{tpu_custom_call.1} parent=1 // pred_region
      _
    $region25: #{tpu_custom_call.1} parent=1 // pred_fallthru
      _
    // Predicated region
    $region26: #{tpu_custom_call.1} parent=1 // pred_check
      _
    $region27: #{tpu_custom_call.1} parent=1 // pred_check_branch
      %40 = sbr.rel (0) target = $region29
    $region28: #{tpu_custom_call.1} parent=1 // pred_region
      _
    $region29: #{tpu_custom_call.1} parent=1 // pred_fallthru
      _
    // Predicated region
    $region30: #{tpu_custom_call.1} parent=1 // pred_check
      _
    $region31: #{tpu_custom_call.1} parent=1 // pred_check_branch
      %42 = sbr.rel (0) target = $region33
    $region32: #{tpu_custom_call.1} parent=1 // pred_region
      _
    $region33: #{tpu_custom_call.1} parent=1 // pred_fallthru
      _
    // Predicated region
    $region34: #{tpu_custom_call.1} parent=1 // pred_check
      _
    $region35: #{tpu_custom_call.1} parent=1 // pred_check_branch
      %44 = sbr.rel (0) target = $region37
    $region36: #{tpu_custom_call.1} parent=1 // pred_region
      _
    $region37: #{tpu_custom_call.1} parent=1 // pred_fallthru
      _
    // Predicated region
    $region38: #{tpu_custom_call.1} parent=1 // pred_check
      _
    $region39: #{tpu_custom_call.1} parent=1 // pred_check_branch
      %46 = sbr.rel (0) target = $region41
    $region40: #{tpu_custom_call.1} parent=1 // pred_region
      %47 = dma.done [#allocation4], 512
    $region41: #{tpu_custom_call.1} parent=1 // pred_fallthru
      _
    %v48 = vld [vmem:[%s1] sm:$0xff]
    %v49 = vld [vmem:[%s0] sm:$0xff]
    %v50 = vld [vmem:[%s0 + $0x8] sm:$0xff]
    %v51 = vld [vmem:[%s0 + $0x10] sm:$0xff]
    %v52 = vld [vmem:[%s0 + $0x18] sm:$0xff]
    %v53 = vld [vmem:[%s0 + $0x20] sm:$0xff]
    %v54 = vld [vmem:[%s0 + $0x28] sm:$0xff]
    %v55 = vld [vmem:[%s0 + $0x30] sm:$0xff]
    %v56 = vld [vmem:[%s0 + $0x38] sm:$0xff]
    %v57 = vld [vmem:[%s2] sm:$0xff]
    %v58 = vld [vmem:[%s2 + $0x8] sm:$0xff]
    %v59 = vld [vmem:[%s2 + $0x10] sm:$0xff]
    %v60 = vld [vmem:[%s2 + $0x18] sm:$0xff]
    %v61 = vld [vmem:[%s4] sm:$0x1]
    %v63 = vlaneseq
    %v64 = vshrl.u32 %v63, 7
    %v65 = vsub.s32 0, %v64
    %v66 = vrot.slane %v61, %v65
    %vm68 = vcmask 261120
    %v70 = vsel %vm68, %v49, 0
    %v73 = vsel %vm68, %v50, 0
    %v76 = vsel %vm68, %v51, 0
    %v79 = vsel %vm68, %v52, 0
    %v82 = vsel %vm68, %v53, 0
    %v85 = vsel %vm68, %v54, 0
    %v88 = vsel %vm68, %v55, 0
    %v91 = vsel %vm68, %v56, 0
    %93 = vmatprep.subr.mxu0 0.0
    %94 = vmatpush1.msra.mxu0 %v57
    %95 = vmatprep.subr.mxu0 0.0
    %96 = vmatpush1.msra.mxu0 %v58
    %97 = vmatprep.subr.mxu0 0.0
    %98 = vmatpush1.msra.mxu0 %v59
    %99 = vmatprep.subr.mxu0 0.0
    %100 = vmatpush1.msra.mxu0 %v60
    %101 = vmatprep.subr.mxu0 0.0
    %102 = vmatpush1.msra.mxu0 0.0
    %103 = vmatprep.subr.mxu0 0.0
    %104 = vmatpush1.msra.mxu0 0.0
    %105 = vmatprep.subr.mxu0 0.0
    %106 = vmatpush1.msra.mxu0 0.0
    %107 = vmatprep.subr.mxu0 0.0
    %108 = vmatpush1.msra.mxu0 0.0
    %109 = vmatprep.subr.mxu0 0.0
    %110 = vmatpush1.msra.mxu0 0.0
    %111 = vmatprep.subr.mxu0 0.0
    %112 = vmatpush1.msra.mxu0 0.0
    %113 = vmatprep.subr.mxu0 0.0
    %114 = vmatpush1.msra.mxu0 0.0
    %115 = vmatprep.subr.mxu0 0.0
    %116 = vmatpush1.msra.mxu0 0.0
    %117 = vmatprep.subr.mxu0 0.0
    %118 = vmatpush1.msra.mxu0 0.0
    %119 = vmatprep.subr.mxu0 0.0
    %120 = vmatpush1.msra.mxu0 0.0
    %121 = vmatprep.subr.mxu0 0.0
    %122 = vmatpush1.msra.mxu0 0.0
    %123 = vmatprep.subr.mxu0 0.0
    %124 = vmatpush1.msra.mxu0 0.0
    %125 = vmatprep.subr.mxu0 0.0
    %126 = vmatpush1.msra.mxu0 0.0
    %127 = vmatprep.subr.mxu0 0.0
    %128 = vmatpush1.msra.mxu0 0.0
    %129 = vmatprep.subr.mxu0 0.0
    %130 = vmatpush1.msra.mxu0 0.0
    %131 = vmatprep.subr.mxu0 0.0
    %132 = vmatpush1.msra.mxu0 0.0
    %133 = vmatprep.subr.mxu0 0.0
    %134 = vmatpush1.msra.mxu0 0.0
    %135 = vmatprep.subr.mxu0 0.0
    %136 = vmatpush1.msra.mxu0 0.0
    %137 = vmatprep.subr.mxu0 0.0
    %138 = vmatpush1.msra.mxu0 0.0
    %139 = vmatprep.subr.mxu0 0.0
    %140 = vmatpush1.msra.mxu0 0.0
    %141 = vmatprep.subr.mxu0 0.0
    %142 = vmatpush1.msra.mxu0 0.0
    %143 = vmatprep.subr.mxu0 0.0
    %144 = vmatpush1.msra.mxu0 0.0
    %145 = vmatprep.subr.mxu0 0.0
    %146 = vmatpush1.msra.mxu0 0.0
    %147 = vmatprep.subr.mxu0 0.0
    %148 = vmatpush1.msra.mxu0 0.0
    %149 = vmatprep.subr.mxu0 0.0
    %150 = vmatpush1.msra.mxu0 0.0
    %151 = vmatprep.subr.mxu0 0.0
    %152 = vmatpush1.msra.mxu0 0.0
    %153 = vmatprep.subr.mxu0 0.0
    %154 = vmatpush1.msra.mxu0 0.0
    %155 = vmatprep.subr.mxu0 0.0
    %156 = vmatpush1.msra.mxu0 0.0
    %157 = vmatprep.mubr.f32.mxu0 0.0
    %158 = vmatmul.mubr.f32.gmra.mrb[0].mxu0 %v70
    %v159 = vpop.f32.mrb[0].mxu0
    %v160 = vadd.f32 %v66, %v159
    %v161 = vpop.f32.mrb[0].mxu0
    %162 = vmatprep.mubr.f32.mxu0 0.0
    %163 = vmatmul.mubr.f32.gmra.mrb[0].mxu0 %v73
    %v164 = vpop.f32.mrb[0].mxu0
    %v165 = vadd.f32 %v66, %v164
    %v166 = vpop.f32.mrb[0].mxu0
    %167 = vmatprep.mubr.f32.mxu0 0.0
    %168 = vmatmul.mubr.f32.gmra.mrb[0].mxu0 %v76
    %v169 = vpop.f32.mrb[0].mxu0
    %v170 = vadd.f32 %v66, %v169
    %v171 = vpop.f32.mrb[0].mxu0
    %172 = vmatprep.mubr.f32.mxu0 0.0
    %173 = vmatmul.mubr.f32.gmra.mrb[0].mxu0 %v79
    %v174 = vpop.f32.mrb[0].mxu0
    %v175 = vadd.f32 %v66, %v174
    %v176 = vpop.f32.mrb[0].mxu0
    %177 = vmatprep.mubr.f32.mxu0 0.0
    %178 = vmatmul.mubr.f32.gmra.mrb[0].mxu0 %v82
    %v179 = vpop.f32.mrb[0].mxu0
    %v180 = vadd.f32 %v66, %v179
    %v181 = vpop.f32.mrb[0].mxu0
    %182 = vmatprep.mubr.f32.mxu0 0.0
    %183 = vmatmul.mubr.f32.gmra.mrb[0].mxu0 %v85
    %v184 = vpop.f32.mrb[0].mxu0
    %v185 = vadd.f32 %v66, %v184
    %v186 = vpop.f32.mrb[0].mxu0
    %187 = vmatprep.mubr.f32.mxu0 0.0
    %188 = vmatmul.mubr.f32.gmra.mrb[0].mxu0 %v88
    %v189 = vpop.f32.mrb[0].mxu0
    %v190 = vadd.f32 %v66, %v189
    %v191 = vpop.f32.mrb[0].mxu0
    %192 = vmatprep.mubr.f32.mxu0 0.0
    %193 = vmatmul.mubr.f32.gmra.mrb[0].mxu0 %v91
    %v194 = vpop.f32.mrb[0].mxu0
    %v195 = vadd.f32 %v66, %v194
    %v196 = vpop.f32.mrb[0].mxu0
    %197 = vdwg.mxu0
    %v198 = vld [vmem:[#allocation3] sm:$0xff]
    %v199 = vld [vmem:[#allocation3 + $0x8] sm:$0xff]
    %v200 = vld [vmem:[#allocation3 + $0x10] sm:$0xff]
    %v201 = vld [vmem:[#allocation3 + $0x18] sm:$0xff]
    %v202 = vld [vmem:[%s5] sm:$0xff]
    %v203 = vld [vmem:[%s5 + $0x8] sm:$0xff]
    %v204 = vld [vmem:[%s5 + $0x10] sm:$0xff]
    %v205 = vld [vmem:[%s5 + $0x18] sm:$0xff]
    %v206 = vld [vmem:[%s5 + $0x20] sm:$0xff]
    %v207 = vld [vmem:[%s5 + $0x28] sm:$0xff]
    %v208 = vld [vmem:[%s5 + $0x30] sm:$0xff]
    %v209 = vld [vmem:[%s5 + $0x38] sm:$0xff]
    %v210 = vld [vmem:[%s6] sm:$0x1]
    %v212 = vlaneseq
    %v213 = vshrl.u32 %v212, 7
    %v214 = vsub.s32 0, %v213
    %v215 = vrot.slane %v210, %v214
    %v217 = vlaneseq
    %v218 = vand.u32 %v217, 127
    %vm219 = vcmp.ge.s32.totalorder %v218, 64
    %vm220 = vcmp.lt.s32.totalorder %v218, 96
    %vm221 = vmand %vm219, %vm220
    %v222 = vsel %vm221, 1.0, 0.5
    %v224 = vsel %vm68, %v48, 0
    %226 = vmatprep.subr.mxu0 0.0
    %227 = vmatpush1.msra.mxu0 %v198
    %228 = vmatprep.subr.mxu0 0.0
    %229 = vmatpush1.msra.mxu0 %v199
    %230 = vmatprep.subr.mxu0 0.0
    %231 = vmatpush1.msra.mxu0 %v200
    %232 = vmatprep.subr.mxu0 0.0
    %233 = vmatpush1.msra.mxu0 %v201
    %234 = vmatprep.subr.mxu0 0.0
    %235 = vmatpush1.msra.mxu0 0.0
    %236 = vmatprep.subr.mxu0 0.0
    %237 = vmatpush1.msra.mxu0 0.0
    %238 = vmatprep.subr.mxu0 0.0
    %239 = vmatpush1.msra.mxu0 0.0
    %240 = vmatprep.subr.mxu0 0.0
    %241 = vmatpush1.msra.mxu0 0.0
    %242 = vmatprep.subr.mxu0 0.0
    %243 = vmatpush1.msra.mxu0 0.0
    %244 = vmatprep.subr.mxu0 0.0
    %245 = vmatpush1.msra.mxu0 0.0
    %246 = vmatprep.subr.mxu0 0.0
    %247 = vmatpush1.msra.mxu0 0.0
    %248 = vmatprep.subr.mxu0 0.0
    %249 = vmatpush1.msra.mxu0 0.0
    %250 = vmatprep.subr.mxu0 0.0
    %251 = vmatpush1.msra.mxu0 0.0
    %252 = vmatprep.subr.mxu0 0.0
    %253 = vmatpush1.msra.mxu0 0.0
    %254 = vmatprep.subr.mxu0 0.0
    %255 = vmatpush1.msra.mxu0 0.0
    %256 = vmatprep.subr.mxu0 0.0
    %257 = vmatpush1.msra.mxu0 0.0
    %258 = vmatprep.subr.mxu0 0.0
    %259 = vmatpush1.msra.mxu0 0.0
    %260 = vmatprep.subr.mxu0 0.0
    %261 = vmatpush1.msra.mxu0 0.0
    %262 = vmatprep.subr.mxu0 0.0
    %263 = vmatpush1.msra.mxu0 0.0
    %264 = vmatprep.subr.mxu0 0.0
    %265 = vmatpush1.msra.mxu0 0.0
    %266 = vmatprep.subr.mxu0 0.0
    %267 = vmatpush1.msra.mxu0 0.0
    %268 = vmatprep.subr.mxu0 0.0
    %269 = vmatpush1.msra.mxu0 0.0
    %270 = vmatprep.subr.mxu0 0.0
    %271 = vmatpush1.msra.mxu0 0.0
    %272 = vmatprep.subr.mxu0 0.0
    %273 = vmatpush1.msra.mxu0 0.0
    %274 = vmatprep.subr.mxu0 0.0
    %275 = vmatpush1.msra.mxu0 0.0
    %276 = vmatprep.subr.mxu0 0.0
    %277 = vmatpush1.msra.mxu0 0.0
    %278 = vmatprep.subr.mxu0 0.0
    %279 = vmatpush1.msra.mxu0 0.0
    %280 = vmatprep.subr.mxu0 0.0
    %281 = vmatpush1.msra.mxu0 0.0
    %282 = vmatprep.subr.mxu0 0.0
    %283 = vmatpush1.msra.mxu0 0.0
    %284 = vmatprep.subr.mxu0 0.0
    %285 = vmatpush1.msra.mxu0 0.0
    %286 = vmatprep.subr.mxu0 0.0
    %287 = vmatpush1.msra.mxu0 0.0
    %288 = vmatprep.subr.mxu0 0.0
    %289 = vmatpush1.msra.mxu0 0.0
    %290 = vmatprep.mubr.f32.mxu0 0.0
    %291 = vmatmul.mubr.f32.gmra.mrb[0].mxu0 %v224
    %v292 = vpop.f32.mrb[0].mxu0
    %v293 = vadd.f32 0.0, %v292
    %v294 = vpop.f32.mrb[0].mxu0
    %295 = vdwg.mxu0
    %v296 = vadd.f32 %v160, %v293
    %v297 = vmul.f32 %v296, %v222
    %v298 = vtanh.pop %v297
    %v299 = vmul.f32 %v298, 0.5
    %v300 = vadd.f32 %v299, 0.5
    %v301 = vsel %vm221, %v298, %v300
    %v302 = vmul.f32 %v301, 0.0
    %304 = vrot.lane.b32.xlu0 %v301, 64
    %v305 = vpop.permute.xlu0 %304
    %v307 = vmul.f32 %v301, %v305
    %309 = vrot.lane.b32.xlu0 %v307, 32
    %v310 = vpop.permute.xlu0 %309
    %v312 = vadd.f32 %v302, %v310
    %v313 = vtanh.pop %v312
    %315 = vrot.lane.b32.xlu0 %v313, 64
    %v316 = vpop.permute.xlu0 %315
    %v318 = vmul.f32 %v301, %v316
    %320 = vrot.lane.b32.xlu0 %v318, 32
    %v321 = vpop.permute.xlu0 %320
    %323 = vrot.lane.b32.xlu0 %v48, 32
    %v324 = vpop.permute.xlu0 %323
    %v326 = vsel %vm68, %v321, %v324
    %vm327 = vcmask 523264
    %v329 = vsel %vm327, %v326, 0
    %331 = vmatprep.subr.mxu0 0.0
    %332 = vmatpush1.msra.mxu0 %v202
    %333 = vmatprep.subr.mxu0 0.0
    %334 = vmatpush1.msra.mxu0 %v203
    %335 = vmatprep.subr.mxu0 0.0
    %336 = vmatpush1.msra.mxu0 %v204
    %337 = vmatprep.subr.mxu0 0.0
    %338 = vmatpush1.msra.mxu0 %v205
    %339 = vmatprep.subr.mxu0 0.0
    %340 = vmatpush1.msra.mxu0 %v206
    %341 = vmatprep.subr.mxu0 0.0
    %342 = vmatpush1.msra.mxu0 %v207
    %343 = vmatprep.subr.mxu0 0.0
    %344 = vmatpush1.msra.mxu0 %v208
    %345 = vmatprep.subr.mxu0 0.0
    %346 = vmatpush1.msra.mxu0 %v209
    %347 = vmatprep.subr.mxu0 0.0
    %348 = vmatpush1.msra.mxu0 0.0
    %349 = vmatprep.subr.mxu0 0.0
    %350 = vmatpush1.msra.mxu0 0.0
    %351 = vmatprep.subr.mxu0 0.0
    %352 = vmatpush1.msra.mxu0 0.0
    %353 = vmatprep.subr.mxu0 0.0
    %354 = vmatpush1.msra.mxu0 0.0
    %355 = vmatprep.subr.mxu0 0.0
    %356 = vmatpush1.msra.mxu0 0.0
    %357 = vmatprep.subr.mxu0 0.0
    %358 = vmatpush1.msra.mxu0 0.0
    %359 = vmatprep.subr.mxu0 0.0
    %360 = vmatpush1.msra.mxu0 0.0
    %361 = vmatprep.subr.mxu0 0.0
    %362 = vmatpush1.msra.mxu0 0.0
    %363 = vmatprep.subr.mxu0 0.0
    %364 = vmatpush1.msra.mxu0 0.0
    %365 = vmatprep.subr.mxu0 0.0
    %366 = vmatpush1.msra.mxu0 0.0
    %367 = vmatprep.subr.mxu0 0.0
    %368 = vmatpush1.msra.mxu0 0.0
    %369 = vmatprep.subr.mxu0 0.0
    %370 = vmatpush1.msra.mxu0 0.0
    %371 = vmatprep.subr.mxu0 0.0
    %372 = vmatpush1.msra.mxu0 0.0
    %373 = vmatprep.subr.mxu0 0.0
    %374 = vmatpush1.msra.mxu0 0.0
    %375 = vmatprep.subr.mxu0 0.0
    %376 = vmatpush1.msra.mxu0 0.0
    %377 = vmatprep.subr.mxu0 0.0
    %378 = vmatpush1.msra.mxu0 0.0
    %379 = vmatprep.subr.mxu0 0.0
    %380 = vmatpush1.msra.mxu0 0.0
    %381 = vmatprep.subr.mxu0 0.0
    %382 = vmatpush1.msra.mxu0 0.0
    %383 = vmatprep.subr.mxu0 0.0
    %384 = vmatpush1.msra.mxu0 0.0
    %385 = vmatprep.subr.mxu0 0.0
    %386 = vmatpush1.msra.mxu0 0.0
    %387 = vmatprep.subr.mxu0 0.0
    %388 = vmatpush1.msra.mxu0 0.0
    %389 = vmatprep.subr.mxu0 0.0
    %390 = vmatpush1.msra.mxu0 0.0
    %391 = vmatprep.subr.mxu0 0.0
    %392 = vmatpush1.msra.mxu0 0.0
    %393 = vmatprep.subr.mxu0 0.0
    %394 = vmatpush1.msra.mxu0 0.0
    %395 = vmatprep.mubr.f32.mxu0 0.0
    %396 = vmatmul.mubr.f32.gmra.mrb[0].mxu0 %v329
    %v397 = vpop.f32.mrb[0].mxu0
    %v398 = vadd.f32 %v215, %v397
    %v399 = vpop.f32.mrb[0].mxu0
    %400 = vdwg.mxu0
    %v401 = vmul.f32 %v398, %v222
    %v402 = vtanh.pop %v401
    %v403 = vmul.f32 %v402, 0.5
    %v404 = vadd.f32 %v403, 0.5
    %v405 = vsel %vm221, %v402, %v404
    %v406 = vmul.f32 %v405, 0.0
    %408 = vrot.lane.b32.xlu0 %v405, 64
    %v409 = vpop.permute.xlu0 %408
    %v411 = vmul.f32 %v405, %v409
    %413 = vrot.lane.b32.xlu0 %v411, 32
    %v414 = vpop.permute.xlu0 %413
    %v416 = vadd.f32 %v406, %v414
    %v417 = vtanh.pop %v416
    %419 = vrot.lane.b32.xlu0 %v417, 64
    %v420 = vpop.permute.xlu0 %419
    %v422 = vmul.f32 %v405, %v420
    %v423 = vsel %vm68, %v321, 0
    %425 = vmatprep.subr.mxu0 0.0
    %426 = vmatpush1.msra.mxu0 %v198
    %427 = vmatprep.subr.mxu0 0.0
    %428 = vmatpush1.msra.mxu0 %v199
    %429 = vmatprep.subr.mxu0 0.0
    %430 = vmatpush1.msra.mxu0 %v200
    %431 = vmatprep.subr.mxu0 0.0
    %432 = vmatpush1.msra.mxu0 %v201
    %433 = vmatprep.subr.mxu0 0.0
    %434 = vmatpush1.msra.mxu0 0.0
    %435 = vmatprep.subr.mxu0 0.0
    %436 = vmatpush1.msra.mxu0 0.0
    %437 = vmatprep.subr.mxu0 0.0
    %438 = vmatpush1.msra.mxu0 0.0
    %439 = vmatprep.subr.mxu0 0.0
    %440 = vmatpush1.msra.mxu0 0.0
    %441 = vmatprep.subr.mxu0 0.0
    %442 = vmatpush1.msra.mxu0 0.0
    %443 = vmatprep.subr.mxu0 0.0
    %444 = vmatpush1.msra.mxu0 0.0
    %445 = vmatprep.subr.mxu0 0.0
    %446 = vmatpush1.msra.mxu0 0.0
    %447 = vmatprep.subr.mxu0 0.0
    %448 = vmatpush1.msra.mxu0 0.0
    %449 = vmatprep.subr.mxu0 0.0
    %450 = vmatpush1.msra.mxu0 0.0
    %451 = vmatprep.subr.mxu0 0.0
    %452 = vmatpush1.msra.mxu0 0.0
    %453 = vmatprep.subr.mxu0 0.0
    %454 = vmatpush1.msra.mxu0 0.0
    %455 = vmatprep.subr.mxu0 0.0
    %456 = vmatpush1.msra.mxu0 0.0
    %457 = vmatprep.subr.mxu0 0.0
    %458 = vmatpush1.msra.mxu0 0.0
    %459 = vmatprep.subr.mxu0 0.0
    %460 = vmatpush1.msra.mxu0 0.0
    %461 = vmatprep.subr.mxu0 0.0
    %462 = vmatpush1.msra.mxu0 0.0
    %463 = vmatprep.subr.mxu0 0.0
    %464 = vmatpush1.msra.mxu0 0.0
    %465 = vmatprep.subr.mxu0 0.0
    %466 = vmatpush1.msra.mxu0 0.0
    %467 = vmatprep.subr.mxu0 0.0
    %468 = vmatpush1.msra.mxu0 0.0
    %469 = vmatprep.subr.mxu0 0.0
    %470 = vmatpush1.msra.mxu0 0.0
    %471 = vmatprep.subr.mxu0 0.0
    %472 = vmatpush1.msra.mxu0 0.0
    %473 = vmatprep.subr.mxu0 0.0
    %474 = vmatpush1.msra.mxu0 0.0
    %475 = vmatprep.subr.mxu0 0.0
    %476 = vmatpush1.msra.mxu0 0.0
    %477 = vmatprep.subr.mxu0 0.0
    %478 = vmatpush1.msra.mxu0 0.0
    %479 = vmatprep.subr.mxu0 0.0
    %480 = vmatpush1.msra.mxu0 0.0
    %481 = vmatprep.subr.mxu0 0.0
    %482 = vmatpush1.msra.mxu0 0.0
    %483 = vmatprep.subr.mxu0 0.0
    %484 = vmatpush1.msra.mxu0 0.0
    %485 = vmatprep.subr.mxu0 0.0
    %486 = vmatpush1.msra.mxu0 0.0
    %487 = vmatprep.subr.mxu0 0.0
    %488 = vmatpush1.msra.mxu0 0.0
    %489 = vmatprep.mubr.f32.mxu0 0.0
    %490 = vmatmul.mubr.f32.gmra.mrb[0].mxu0 %v423
    %v491 = vpop.f32.mrb[0].mxu0
    %v492 = vadd.f32 0.0, %v491
    %v493 = vpop.f32.mrb[0].mxu0
    %494 = vdwg.mxu0
    %v495 = vadd.f32 %v165, %v492
    %v496 = vmul.f32 %v495, %v222
    %v497 = vtanh.pop %v496
    %v498 = vmul.f32 %v497, 0.5
    %v499 = vadd.f32 %v498, 0.5
    %v500 = vsel %vm221, %v497, %v499
    %v501 = vmul.f32 %v500, %v312
    %503 = vrot.lane.b32.xlu0 %v500, 64
    %v504 = vpop.permute.xlu0 %503
    %v506 = vmul.f32 %v500, %v504
    %508 = vrot.lane.b32.xlu0 %v506, 32
    %v509 = vpop.permute.xlu0 %508
    %v511 = vadd.f32 %v501, %v509
    %v512 = vtanh.pop %v511
    %514 = vrot.lane.b32.xlu0 %v512, 64
    %v515 = vpop.permute.xlu0 %514
    %v517 = vmul.f32 %v500, %v515
    %519 = vrot.lane.b32.xlu0 %v517, 32
    %v520 = vpop.permute.xlu0 %519
    %523 = vrot.lane.b32.xlu0 %v422, 64
    %v524 = vpop.permute.xlu0 %523
    %v526 = vsel %vm68, %v520, %v524
    %v528 = vsel %vm327, %v526, 0
    %530 = vmatprep.subr.mxu0 0.0
    %531 = vmatpush1.msra.mxu0 %v202
    %532 = vmatprep.subr.mxu0 0.0
    %533 = vmatpush1.msra.mxu0 %v203
    %534 = vmatprep.subr.mxu0 0.0
    %535 = vmatpush1.msra.mxu0 %v204
    %536 = vmatprep.subr.mxu0 0.0
    %537 = vmatpush1.msra.mxu0 %v205
    %538 = vmatprep.subr.mxu0 0.0
    %539 = vmatpush1.msra.mxu0 %v206
    %540 = vmatprep.subr.mxu0 0.0
    %541 = vmatpush1.msra.mxu0 %v207
    %542 = vmatprep.subr.mxu0 0.0
    %543 = vmatpush1.msra.mxu0 %v208
    %544 = vmatprep.subr.mxu0 0.0
    %545 = vmatpush1.msra.mxu0 %v209
    %546 = vmatprep.subr.mxu0 0.0
    %547 = vmatpush1.msra.mxu0 0.0
    %548 = vmatprep.subr.mxu0 0.0
    %549 = vmatpush1.msra.mxu0 0.0
    %550 = vmatprep.subr.mxu0 0.0
    %551 = vmatpush1.msra.mxu0 0.0
    %552 = vmatprep.subr.mxu0 0.0
    %553 = vmatpush1.msra.mxu0 0.0
    %554 = vmatprep.subr.mxu0 0.0
    %555 = vmatpush1.msra.mxu0 0.0
    %556 = vmatprep.subr.mxu0 0.0
    %557 = vmatpush1.msra.mxu0 0.0
    %558 = vmatprep.subr.mxu0 0.0
    %559 = vmatpush1.msra.mxu0 0.0
    %560 = vmatprep.subr.mxu0 0.0
    %561 = vmatpush1.msra.mxu0 0.0
    %562 = vmatprep.subr.mxu0 0.0
    %563 = vmatpush1.msra.mxu0 0.0
    %564 = vmatprep.subr.mxu0 0.0
    %565 = vmatpush1.msra.mxu0 0.0
    %566 = vmatprep.subr.mxu0 0.0
    %567 = vmatpush1.msra.mxu0 0.0
    %568 = vmatprep.subr.mxu0 0.0
    %569 = vmatpush1.msra.mxu0 0.0
    %570 = vmatprep.subr.mxu0 0.0
    %571 = vmatpush1.msra.mxu0 0.0
    %572 = vmatprep.subr.mxu0 0.0
    %573 = vmatpush1.msra.mxu0 0.0
    %574 = vmatprep.subr.mxu0 0.0
    %575 = vmatpush1.msra.mxu0 0.0
    %576 = vmatprep.subr.mxu0 0.0
    %577 = vmatpush1.msra.mxu0 0.0
    %578 = vmatprep.subr.mxu0 0.0
    %579 = vmatpush1.msra.mxu0 0.0
    %580 = vmatprep.subr.mxu0 0.0
    %581 = vmatpush1.msra.mxu0 0.0
    %582 = vmatprep.subr.mxu0 0.0
    %583 = vmatpush1.msra.mxu0 0.0
    %584 = vmatprep.subr.mxu0 0.0
    %585 = vmatpush1.msra.mxu0 0.0
    %586 = vmatprep.subr.mxu0 0.0
    %587 = vmatpush1.msra.mxu0 0.0
    %588 = vmatprep.subr.mxu0 0.0
    %589 = vmatpush1.msra.mxu0 0.0
    %590 = vmatprep.subr.mxu0 0.0
    %591 = vmatpush1.msra.mxu0 0.0
    %592 = vmatprep.subr.mxu0 0.0
    %593 = vmatpush1.msra.mxu0 0.0
    %594 = vmatprep.mubr.f32.mxu0 0.0
    %595 = vmatmul.mubr.f32.gmra.mrb[0].mxu0 %v528
    %v596 = vpop.f32.mrb[0].mxu0
    %v597 = vadd.f32 %v215, %v596
    %v598 = vpop.f32.mrb[0].mxu0
    %599 = vdwg.mxu0
    %v600 = vmul.f32 %v597, %v222
    %v601 = vtanh.pop %v600
    %v602 = vmul.f32 %v601, 0.5
    %v603 = vadd.f32 %v602, 0.5
    %v604 = vsel %vm221, %v601, %v603
    %v605 = vmul.f32 %v604, %v416
    %607 = vrot.lane.b32.xlu0 %v604, 64
    %v608 = vpop.permute.xlu0 %607
    %v610 = vmul.f32 %v604, %v608
    %612 = vrot.lane.b32.xlu0 %v610, 32
    %v613 = vpop.permute.xlu0 %612
    %v615 = vadd.f32 %v605, %v613
    %v616 = vtanh.pop %v615
    %618 = vrot.lane.b32.xlu0 %v616, 64
    %v619 = vpop.permute.xlu0 %618
    %v621 = vmul.f32 %v604, %v619
    %v622 = vsel %vm68, %v520, 0
    %624 = vmatprep.subr.mxu0 0.0
    %625 = vmatpush1.msra.mxu0 %v198
    %626 = vmatprep.subr.mxu0 0.0
    %627 = vmatpush1.msra.mxu0 %v199
    %628 = vmatprep.subr.mxu0 0.0
    %629 = vmatpush1.msra.mxu0 %v200
    %630 = vmatprep.subr.mxu0 0.0
    %631 = vmatpush1.msra.mxu0 %v201
    %632 = vmatprep.subr.mxu0 0.0
    %633 = vmatpush1.msra.mxu0 0.0
    %634 = vmatprep.subr.mxu0 0.0
    %635 = vmatpush1.msra.mxu0 0.0
    %636 = vmatprep.subr.mxu0 0.0
    %637 = vmatpush1.msra.mxu0 0.0
    %638 = vmatprep.subr.mxu0 0.0
    %639 = vmatpush1.msra.mxu0 0.0
    %640 = vmatprep.subr.mxu0 0.0
    %641 = vmatpush1.msra.mxu0 0.0
    %642 = vmatprep.subr.mxu0 0.0
    %643 = vmatpush1.msra.mxu0 0.0
    %644 = vmatprep.subr.mxu0 0.0
    %645 = vmatpush1.msra.mxu0 0.0
    %646 = vmatprep.subr.mxu0 0.0
    %647 = vmatpush1.msra.mxu0 0.0
    %648 = vmatprep.subr.mxu0 0.0
    %649 = vmatpush1.msra.mxu0 0.0
    %650 = vmatprep.subr.mxu0 0.0
    %651 = vmatpush1.msra.mxu0 0.0
    %652 = vmatprep.subr.mxu0 0.0
    %653 = vmatpush1.msra.mxu0 0.0
    %654 = vmatprep.subr.mxu0 0.0
    %655 = vmatpush1.msra.mxu0 0.0
    %656 = vmatprep.subr.mxu0 0.0
    %657 = vmatpush1.msra.mxu0 0.0
    %658 = vmatprep.subr.mxu0 0.0
    %659 = vmatpush1.msra.mxu0 0.0
    %660 = vmatprep.subr.mxu0 0.0
    %661 = vmatpush1.msra.mxu0 0.0
    %662 = vmatprep.subr.mxu0 0.0
    %663 = vmatpush1.msra.mxu0 0.0
    %664 = vmatprep.subr.mxu0 0.0
    %665 = vmatpush1.msra.mxu0 0.0
    %666 = vmatprep.subr.mxu0 0.0
    %667 = vmatpush1.msra.mxu0 0.0
    %668 = vmatprep.subr.mxu0 0.0
    %669 = vmatpush1.msra.mxu0 0.0
    %670 = vmatprep.subr.mxu0 0.0
    %671 = vmatpush1.msra.mxu0 0.0
    %672 = vmatprep.subr.mxu0 0.0
    %673 = vmatpush1.msra.mxu0 0.0
    %674 = vmatprep.subr.mxu0 0.0
    %675 = vmatpush1.msra.mxu0 0.0
    %676 = vmatprep.subr.mxu0 0.0
    %677 = vmatpush1.msra.mxu0 0.0
    %678 = vmatprep.subr.mxu0 0.0
    %679 = vmatpush1.msra.mxu0 0.0
    %680 = vmatprep.subr.mxu0 0.0
    %681 = vmatpush1.msra.mxu0 0.0
    %682 = vmatprep.subr.mxu0 0.0
    %683 = vmatpush1.msra.mxu0 0.0
    %684 = vmatprep.subr.mxu0 0.0
    %685 = vmatpush1.msra.mxu0 0.0
    %686 = vmatprep.subr.mxu0 0.0
    %687 = vmatpush1.msra.mxu0 0.0
    %688 = vmatprep.mubr.f32.mxu0 0.0
    %689 = vmatmul.mubr.f32.gmra.mrb[0].mxu0 %v622
    %v690 = vpop.f32.mrb[0].mxu0
    %v691 = vadd.f32 0.0, %v690
    %v692 = vpop.f32.mrb[0].mxu0
    %693 = vdwg.mxu0
    %v694 = vadd.f32 %v170, %v691
    %v695 = vmul.f32 %v694, %v222
    %v696 = vtanh.pop %v695
    %v697 = vmul.f32 %v696, 0.5
    %v698 = vadd.f32 %v697, 0.5
    %v699 = vsel %vm221, %v696, %v698
    %v700 = vmul.f32 %v699, %v511
    %702 = vrot.lane.b32.xlu0 %v699, 64
    %v703 = vpop.permute.xlu0 %702
    %v705 = vmul.f32 %v699, %v703
    %707 = vrot.lane.b32.xlu0 %v705, 32
    %v708 = vpop.permute.xlu0 %707
    %v710 = vadd.f32 %v700, %v708
    %v711 = vtanh.pop %v710
    %713 = vrot.lane.b32.xlu0 %v711, 64
    %v714 = vpop.permute.xlu0 %713
    %v716 = vmul.f32 %v699, %v714
    %718 = vrot.lane.b32.xlu0 %v716, 32
    %v719 = vpop.permute.xlu0 %718
    %722 = vrot.lane.b32.xlu0 %v621, 64
    %v723 = vpop.permute.xlu0 %722
    %v725 = vsel %vm68, %v719, %v723
    %v727 = vsel %vm327, %v725, 0
    %729 = vmatprep.subr.mxu0 0.0
    %730 = vmatpush1.msra.mxu0 %v202
    %731 = vmatprep.subr.mxu0 0.0
    %732 = vmatpush1.msra.mxu0 %v203
    %733 = vmatprep.subr.mxu0 0.0
    %734 = vmatpush1.msra.mxu0 %v204
    %735 = vmatprep.subr.mxu0 0.0
    %736 = vmatpush1.msra.mxu0 %v205
    %737 = vmatprep.subr.mxu0 0.0
    %738 = vmatpush1.msra.mxu0 %v206
    %739 = vmatprep.subr.mxu0 0.0
    %740 = vmatpush1.msra.mxu0 %v207
    %741 = vmatprep.subr.mxu0 0.0
    %742 = vmatpush1.msra.mxu0 %v208
    %743 = vmatprep.subr.mxu0 0.0
    %744 = vmatpush1.msra.mxu0 %v209
    %745 = vmatprep.subr.mxu0 0.0
    %746 = vmatpush1.msra.mxu0 0.0
    %747 = vmatprep.subr.mxu0 0.0
    %748 = vmatpush1.msra.mxu0 0.0
    %749 = vmatprep.subr.mxu0 0.0
    %750 = vmatpush1.msra.mxu0 0.0
    %751 = vmatprep.subr.mxu0 0.0
    %752 = vmatpush1.msra.mxu0 0.0
    %753 = vmatprep.subr.mxu0 0.0
    %754 = vmatpush1.msra.mxu0 0.0
    %755 = vmatprep.subr.mxu0 0.0
    %756 = vmatpush1.msra.mxu0 0.0
    %757 = vmatprep.subr.mxu0 0.0
    %758 = vmatpush1.msra.mxu0 0.0
    %759 = vmatprep.subr.mxu0 0.0
    %760 = vmatpush1.msra.mxu0 0.0
    %761 = vmatprep.subr.mxu0 0.0
    %762 = vmatpush1.msra.mxu0 0.0
    %763 = vmatprep.subr.mxu0 0.0
    %764 = vmatpush1.msra.mxu0 0.0
    %765 = vmatprep.subr.mxu0 0.0
    %766 = vmatpush1.msra.mxu0 0.0
    %767 = vmatprep.subr.mxu0 0.0
    %768 = vmatpush1.msra.mxu0 0.0
    %769 = vmatprep.subr.mxu0 0.0
    %770 = vmatpush1.msra.mxu0 0.0
    %771 = vmatprep.subr.mxu0 0.0
    %772 = vmatpush1.msra.mxu0 0.0
    %773 = vmatprep.subr.mxu0 0.0
    %774 = vmatpush1.msra.mxu0 0.0
    %775 = vmatprep.subr.mxu0 0.0
    %776 = vmatpush1.msra.mxu0 0.0
    %777 = vmatprep.subr.mxu0 0.0
    %778 = vmatpush1.msra.mxu0 0.0
    %779 = vmatprep.subr.mxu0 0.0
    %780 = vmatpush1.msra.mxu0 0.0
    %781 = vmatprep.subr.mxu0 0.0
    %782 = vmatpush1.msra.mxu0 0.0
    %783 = vmatprep.subr.mxu0 0.0
    %784 = vmatpush1.msra.mxu0 0.0
    %785 = vmatprep.subr.mxu0 0.0
    %786 = vmatpush1.msra.mxu0 0.0
    %787 = vmatprep.subr.mxu0 0.0
    %788 = vmatpush1.msra.mxu0 0.0
    %789 = vmatprep.subr.mxu0 0.0
    %790 = vmatpush1.msra.mxu0 0.0
    %791 = vmatprep.subr.mxu0 0.0
    %792 = vmatpush1.msra.mxu0 0.0
    %793 = vmatprep.mubr.f32.mxu0 0.0
    %794 = vmatmul.mubr.f32.gmra.mrb[0].mxu0 %v727
    %v795 = vpop.f32.mrb[0].mxu0
    %v796 = vadd.f32 %v215, %v795
    %v797 = vpop.f32.mrb[0].mxu0
    %798 = vdwg.mxu0
    %v799 = vmul.f32 %v796, %v222
    %v800 = vtanh.pop %v799
    %v801 = vmul.f32 %v800, 0.5
    %v802 = vadd.f32 %v801, 0.5
    %v803 = vsel %vm221, %v800, %v802
    %v804 = vmul.f32 %v803, %v615
    %806 = vrot.lane.b32.xlu0 %v803, 64
    %v807 = vpop.permute.xlu0 %806
    %v809 = vmul.f32 %v803, %v807
    %811 = vrot.lane.b32.xlu0 %v809, 32
    %v812 = vpop.permute.xlu0 %811
    %v814 = vadd.f32 %v804, %v812
    %v815 = vtanh.pop %v814
    %817 = vrot.lane.b32.xlu0 %v815, 64
    %v818 = vpop.permute.xlu0 %817
    %v820 = vmul.f32 %v803, %v818
    %v821 = vsel %vm68, %v719, 0
    %823 = vmatprep.subr.mxu0 0.0
    %824 = vmatpush1.msra.mxu0 %v198
    %825 = vmatprep.subr.mxu0 0.0
    %826 = vmatpush1.msra.mxu0 %v199
    %827 = vmatprep.subr.mxu0 0.0
    %828 = vmatpush1.msra.mxu0 %v200
    %829 = vmatprep.subr.mxu0 0.0
    %830 = vmatpush1.msra.mxu0 %v201
    %831 = vmatprep.subr.mxu0 0.0
    %832 = vmatpush1.msra.mxu0 0.0
    %833 = vmatprep.subr.mxu0 0.0
    %834 = vmatpush1.msra.mxu0 0.0
    %835 = vmatprep.subr.mxu0 0.0
    %836 = vmatpush1.msra.mxu0 0.0
    %837 = vmatprep.subr.mxu0 0.0
    %838 = vmatpush1.msra.mxu0 0.0
    %839 = vmatprep.subr.mxu0 0.0
    %840 = vmatpush1.msra.mxu0 0.0
    %841 = vmatprep.subr.mxu0 0.0
    %842 = vmatpush1.msra.mxu0 0.0
    %843 = vmatprep.subr.mxu0 0.0
    %844 = vmatpush1.msra.mxu0 0.0
    %845 = vmatprep.subr.mxu0 0.0
    %846 = vmatpush1.msra.mxu0 0.0
    %847 = vmatprep.subr.mxu0 0.0
    %848 = vmatpush1.msra.mxu0 0.0
    %849 = vmatprep.subr.mxu0 0.0
    %850 = vmatpush1.msra.mxu0 0.0
    %851 = vmatprep.subr.mxu0 0.0
    %852 = vmatpush1.msra.mxu0 0.0
    %853 = vmatprep.subr.mxu0 0.0
    %854 = vmatpush1.msra.mxu0 0.0
    %855 = vmatprep.subr.mxu0 0.0
    %856 = vmatpush1.msra.mxu0 0.0
    %857 = vmatprep.subr.mxu0 0.0
    %858 = vmatpush1.msra.mxu0 0.0
    %859 = vmatprep.subr.mxu0 0.0
    %860 = vmatpush1.msra.mxu0 0.0
    %861 = vmatprep.subr.mxu0 0.0
    %862 = vmatpush1.msra.mxu0 0.0
    %863 = vmatprep.subr.mxu0 0.0
    %864 = vmatpush1.msra.mxu0 0.0
    %865 = vmatprep.subr.mxu0 0.0
    %866 = vmatpush1.msra.mxu0 0.0
    %867 = vmatprep.subr.mxu0 0.0
    %868 = vmatpush1.msra.mxu0 0.0
    %869 = vmatprep.subr.mxu0 0.0
    %870 = vmatpush1.msra.mxu0 0.0
    %871 = vmatprep.subr.mxu0 0.0
    %872 = vmatpush1.msra.mxu0 0.0
    %873 = vmatprep.subr.mxu0 0.0
    %874 = vmatpush1.msra.mxu0 0.0
    %875 = vmatprep.subr.mxu0 0.0
    %876 = vmatpush1.msra.mxu0 0.0
    %877 = vmatprep.subr.mxu0 0.0
    %878 = vmatpush1.msra.mxu0 0.0
    %879 = vmatprep.subr.mxu0 0.0
    %880 = vmatpush1.msra.mxu0 0.0
    %881 = vmatprep.subr.mxu0 0.0
    %882 = vmatpush1.msra.mxu0 0.0
    %883 = vmatprep.subr.mxu0 0.0
    %884 = vmatpush1.msra.mxu0 0.0
    %885 = vmatprep.subr.mxu0 0.0
    %886 = vmatpush1.msra.mxu0 0.0
    %887 = vmatprep.mubr.f32.mxu0 0.0
    %888 = vmatmul.mubr.f32.gmra.mrb[0].mxu0 %v821
    %v889 = vpop.f32.mrb[0].mxu0
    %v890 = vadd.f32 0.0, %v889
    %v891 = vpop.f32.mrb[0].mxu0
    %892 = vdwg.mxu0
    %v893 = vadd.f32 %v175, %v890
    %v894 = vmul.f32 %v893, %v222
    %v895 = vtanh.pop %v894
    %v896 = vmul.f32 %v895, 0.5
    %v897 = vadd.f32 %v896, 0.5
    %v898 = vsel %vm221, %v895, %v897
    %v899 = vmul.f32 %v898, %v710
    %901 = vrot.lane.b32.xlu0 %v898, 64
    %v902 = vpop.permute.xlu0 %901
    %v904 = vmul.f32 %v898, %v902
    %906 = vrot.lane.b32.xlu0 %v904, 32
    %v907 = vpop.permute.xlu0 %906
    %v909 = vadd.f32 %v899, %v907
    %v910 = vtanh.pop %v909
    %912 = vrot.lane.b32.xlu0 %v910, 64
    %v913 = vpop.permute.xlu0 %912
    %v915 = vmul.f32 %v898, %v913
    %917 = vrot.lane.b32.xlu0 %v915, 32
    %v918 = vpop.permute.xlu0 %917
    %921 = vrot.lane.b32.xlu0 %v820, 64
    %v922 = vpop.permute.xlu0 %921
    %v924 = vsel %vm68, %v918, %v922
    %v926 = vsel %vm327, %v924, 0
    %928 = vmatprep.subr.mxu0 0.0
    %929 = vmatpush1.msra.mxu0 %v202
    %930 = vmatprep.subr.mxu0 0.0
    %931 = vmatpush1.msra.mxu0 %v203
    %932 = vmatprep.subr.mxu0 0.0
    %933 = vmatpush1.msra.mxu0 %v204
    %934 = vmatprep.subr.mxu0 0.0
    %935 = vmatpush1.msra.mxu0 %v205
    %936 = vmatprep.subr.mxu0 0.0
    %937 = vmatpush1.msra.mxu0 %v206
    %938 = vmatprep.subr.mxu0 0.0
    %939 = vmatpush1.msra.mxu0 %v207
    %940 = vmatprep.subr.mxu0 0.0
    %941 = vmatpush1.msra.mxu0 %v208
    %942 = vmatprep.subr.mxu0 0.0
    %943 = vmatpush1.msra.mxu0 %v209
    %944 = vmatprep.subr.mxu0 0.0
    %945 = vmatpush1.msra.mxu0 0.0
    %946 = vmatprep.subr.mxu0 0.0
    %947 = vmatpush1.msra.mxu0 0.0
    %948 = vmatprep.subr.mxu0 0.0
    %949 = vmatpush1.msra.mxu0 0.0
    %950 = vmatprep.subr.mxu0 0.0
    %951 = vmatpush1.msra.mxu0 0.0
    %952 = vmatprep.subr.mxu0 0.0
    %953 = vmatpush1.msra.mxu0 0.0
    %954 = vmatprep.subr.mxu0 0.0
    %955 = vmatpush1.msra.mxu0 0.0
    %956 = vmatprep.subr.mxu0 0.0
    %957 = vmatpush1.msra.mxu0 0.0
    %958 = vmatprep.subr.mxu0 0.0
    %959 = vmatpush1.msra.mxu0 0.0
    %960 = vmatprep.subr.mxu0 0.0
    %961 = vmatpush1.msra.mxu0 0.0
    %962 = vmatprep.subr.mxu0 0.0
    %963 = vmatpush1.msra.mxu0 0.0
    %964 = vmatprep.subr.mxu0 0.0
    %965 = vmatpush1.msra.mxu0 0.0
    %966 = vmatprep.subr.mxu0 0.0
    %967 = vmatpush1.msra.mxu0 0.0
    %968 = vmatprep.subr.mxu0 0.0
    %969 = vmatpush1.msra.mxu0 0.0
    %970 = vmatprep.subr.mxu0 0.0
    %971 = vmatpush1.msra.mxu0 0.0
    %972 = vmatprep.subr.mxu0 0.0
    %973 = vmatpush1.msra.mxu0 0.0
    %974 = vmatprep.subr.mxu0 0.0
    %975 = vmatpush1.msra.mxu0 0.0
    %976 = vmatprep.subr.mxu0 0.0
    %977 = vmatpush1.msra.mxu0 0.0
    %978 = vmatprep.subr.mxu0 0.0
    %979 = vmatpush1.msra.mxu0 0.0
    %980 = vmatprep.subr.mxu0 0.0
    %981 = vmatpush1.msra.mxu0 0.0
    %982 = vmatprep.subr.mxu0 0.0
    %983 = vmatpush1.msra.mxu0 0.0
    %984 = vmatprep.subr.mxu0 0.0
    %985 = vmatpush1.msra.mxu0 0.0
    %986 = vmatprep.subr.mxu0 0.0
    %987 = vmatpush1.msra.mxu0 0.0
    %988 = vmatprep.subr.mxu0 0.0
    %989 = vmatpush1.msra.mxu0 0.0
    %990 = vmatprep.subr.mxu0 0.0
    %991 = vmatpush1.msra.mxu0 0.0
    %992 = vmatprep.mubr.f32.mxu0 0.0
    %993 = vmatmul.mubr.f32.gmra.mrb[0].mxu0 %v926
    %v994 = vpop.f32.mrb[0].mxu0
    %v995 = vadd.f32 %v215, %v994
    %v996 = vpop.f32.mrb[0].mxu0
    %997 = vdwg.mxu0
    %v998 = vmul.f32 %v995, %v222
    %v999 = vtanh.pop %v998
    %v1000 = vmul.f32 %v999, 0.5
    %v1001 = vadd.f32 %v1000, 0.5
    %v1002 = vsel %vm221, %v999, %v1001
    %v1003 = vmul.f32 %v1002, %v814
    %1005 = vrot.lane.b32.xlu0 %v1002, 64
    %v1006 = vpop.permute.xlu0 %1005
    %v1008 = vmul.f32 %v1002, %v1006
    %1010 = vrot.lane.b32.xlu0 %v1008, 32
    %v1011 = vpop.permute.xlu0 %1010
    %v1013 = vadd.f32 %v1003, %v1011
    %v1014 = vtanh.pop %v1013
    %1016 = vrot.lane.b32.xlu0 %v1014, 64
    %v1017 = vpop.permute.xlu0 %1016
    %v1019 = vmul.f32 %v1002, %v1017
    %v1020 = vsel %vm68, %v918, 0
    %1022 = vmatprep.subr.mxu0 0.0
    %1023 = vmatpush1.msra.mxu0 %v198
    %1024 = vmatprep.subr.mxu0 0.0
    %1025 = vmatpush1.msra.mxu0 %v199
    %1026 = vmatprep.subr.mxu0 0.0
    %1027 = vmatpush1.msra.mxu0 %v200
    %1028 = vmatprep.subr.mxu0 0.0
    %1029 = vmatpush1.msra.mxu0 %v201
    %1030 = vmatprep.subr.mxu0 0.0
    %1031 = vmatpush1.msra.mxu0 0.0
    %1032 = vmatprep.subr.mxu0 0.0
    %1033 = vmatpush1.msra.mxu0 0.0
    %1034 = vmatprep.subr.mxu0 0.0
    %1035 = vmatpush1.msra.mxu0 0.0
    %1036 = vmatprep.subr.mxu0 0.0
    %1037 = vmatpush1.msra.mxu0 0.0
    %1038 = vmatprep.subr.mxu0 0.0
    %1039 = vmatpush1.msra.mxu0 0.0
    %1040 = vmatprep.subr.mxu0 0.0
    %1041 = vmatpush1.msra.mxu0 0.0
    %1042 = vmatprep.subr.mxu0 0.0
    %1043 = vmatpush1.msra.mxu0 0.0
    %1044 = vmatprep.subr.mxu0 0.0
    %1045 = vmatpush1.msra.mxu0 0.0
    %1046 = vmatprep.subr.mxu0 0.0
    %1047 = vmatpush1.msra.mxu0 0.0
    %1048 = vmatprep.subr.mxu0 0.0
    %1049 = vmatpush1.msra.mxu0 0.0
    %1050 = vmatprep.subr.mxu0 0.0
    %1051 = vmatpush1.msra.mxu0 0.0
    %1052 = vmatprep.subr.mxu0 0.0
    %1053 = vmatpush1.msra.mxu0 0.0
    %1054 = vmatprep.subr.mxu0 0.0
    %1055 = vmatpush1.msra.mxu0 0.0
    %1056 = vmatprep.subr.mxu0 0.0
    %1057 = vmatpush1.msra.mxu0 0.0
    %1058 = vmatprep.subr.mxu0 0.0
    %1059 = vmatpush1.msra.mxu0 0.0
    %1060 = vmatprep.subr.mxu0 0.0
    %1061 = vmatpush1.msra.mxu0 0.0
    %1062 = vmatprep.subr.mxu0 0.0
    %1063 = vmatpush1.msra.mxu0 0.0
    %1064 = vmatprep.subr.mxu0 0.0
    %1065 = vmatpush1.msra.mxu0 0.0
    %1066 = vmatprep.subr.mxu0 0.0
    %1067 = vmatpush1.msra.mxu0 0.0
    %1068 = vmatprep.subr.mxu0 0.0
    %1069 = vmatpush1.msra.mxu0 0.0
    %1070 = vmatprep.subr.mxu0 0.0
    %1071 = vmatpush1.msra.mxu0 0.0
    %1072 = vmatprep.subr.mxu0 0.0
    %1073 = vmatpush1.msra.mxu0 0.0
    %1074 = vmatprep.subr.mxu0 0.0
    %1075 = vmatpush1.msra.mxu0 0.0
    %1076 = vmatprep.subr.mxu0 0.0
    %1077 = vmatpush1.msra.mxu0 0.0
    %1078 = vmatprep.subr.mxu0 0.0
    %1079 = vmatpush1.msra.mxu0 0.0
    %1080 = vmatprep.subr.mxu0 0.0
    %1081 = vmatpush1.msra.mxu0 0.0
    %1082 = vmatprep.subr.mxu0 0.0
    %1083 = vmatpush1.msra.mxu0 0.0
    %1084 = vmatprep.subr.mxu0 0.0
    %1085 = vmatpush1.msra.mxu0 0.0
    %1086 = vmatprep.mubr.f32.mxu0 0.0
    %1087 = vmatmul.mubr.f32.gmra.mrb[0].mxu0 %v1020
    %v1088 = vpop.f32.mrb[0].mxu0
    %v1089 = vadd.f32 0.0, %v1088
    %v1090 = vpop.f32.mrb[0].mxu0
    %1091 = vdwg.mxu0
    %v1092 = vadd.f32 %v180, %v1089
    %v1093 = vmul.f32 %v1092, %v222
    %v1094 = vtanh.pop %v1093
    %v1095 = vmul.f32 %v1094, 0.5
    %v1096 = vadd.f32 %v1095, 0.5
    %v1097 = vsel %vm221, %v1094, %v1096
    %v1098 = vmul.f32 %v1097, %v909
    %1100 = vrot.lane.b32.xlu0 %v1097, 64
    %v1101 = vpop.permute.xlu0 %1100
    %v1103 = vmul.f32 %v1097, %v1101
    %1105 = vrot.lane.b32.xlu0 %v1103, 32
    %v1106 = vpop.permute.xlu0 %1105
    %v1108 = vadd.f32 %v1098, %v1106
    %v1109 = vtanh.pop %v1108
    %1111 = vrot.lane.b32.xlu0 %v1109, 64
    %v1112 = vpop.permute.xlu0 %1111
    %v1114 = vmul.f32 %v1097, %v1112
    %1116 = vrot.lane.b32.xlu0 %v1114, 32
    %v1117 = vpop.permute.xlu0 %1116
    %1120 = vrot.lane.b32.xlu0 %v1019, 64
    %v1121 = vpop.permute.xlu0 %1120
    %v1123 = vsel %vm68, %v1117, %v1121
    %v1125 = vsel %vm327, %v1123, 0
    %1127 = vmatprep.subr.mxu0 0.0
    %1128 = vmatpush1.msra.mxu0 %v202
    %1129 = vmatprep.subr.mxu0 0.0
    %1130 = vmatpush1.msra.mxu0 %v203
    %1131 = vmatprep.subr.mxu0 0.0
    %1132 = vmatpush1.msra.mxu0 %v204
    %1133 = vmatprep.subr.mxu0 0.0
    %1134 = vmatpush1.msra.mxu0 %v205
    %1135 = vmatprep.subr.mxu0 0.0
    %1136 = vmatpush1.msra.mxu0 %v206
    %1137 = vmatprep.subr.mxu0 0.0
    %1138 = vmatpush1.msra.mxu0 %v207
    %1139 = vmatprep.subr.mxu0 0.0
    %1140 = vmatpush1.msra.mxu0 %v208
    %1141 = vmatprep.subr.mxu0 0.0
    %1142 = vmatpush1.msra.mxu0 %v209
    %1143 = vmatprep.subr.mxu0 0.0
    %1144 = vmatpush1.msra.mxu0 0.0
    %1145 = vmatprep.subr.mxu0 0.0
    %1146 = vmatpush1.msra.mxu0 0.0
    %1147 = vmatprep.subr.mxu0 0.0
    %1148 = vmatpush1.msra.mxu0 0.0
    %1149 = vmatprep.subr.mxu0 0.0
    %1150 = vmatpush1.msra.mxu0 0.0
    %1151 = vmatprep.subr.mxu0 0.0
    %1152 = vmatpush1.msra.mxu0 0.0
    %1153 = vmatprep.subr.mxu0 0.0
    %1154 = vmatpush1.msra.mxu0 0.0
    %1155 = vmatprep.subr.mxu0 0.0
    %1156 = vmatpush1.msra.mxu0 0.0
    %1157 = vmatprep.subr.mxu0 0.0
    %1158 = vmatpush1.msra.mxu0 0.0
    %1159 = vmatprep.subr.mxu0 0.0
    %1160 = vmatpush1.msra.mxu0 0.0
    %1161 = vmatprep.subr.mxu0 0.0
    %1162 = vmatpush1.msra.mxu0 0.0
    %1163 = vmatprep.subr.mxu0 0.0
    %1164 = vmatpush1.msra.mxu0 0.0
    %1165 = vmatprep.subr.mxu0 0.0
    %1166 = vmatpush1.msra.mxu0 0.0
    %1167 = vmatprep.subr.mxu0 0.0
    %1168 = vmatpush1.msra.mxu0 0.0
    %1169 = vmatprep.subr.mxu0 0.0
    %1170 = vmatpush1.msra.mxu0 0.0
    %1171 = vmatprep.subr.mxu0 0.0
    %1172 = vmatpush1.msra.mxu0 0.0
    %1173 = vmatprep.subr.mxu0 0.0
    %1174 = vmatpush1.msra.mxu0 0.0
    %1175 = vmatprep.subr.mxu0 0.0
    %1176 = vmatpush1.msra.mxu0 0.0
    %1177 = vmatprep.subr.mxu0 0.0
    %1178 = vmatpush1.msra.mxu0 0.0
    %1179 = vmatprep.subr.mxu0 0.0
    %1180 = vmatpush1.msra.mxu0 0.0
    %1181 = vmatprep.subr.mxu0 0.0
    %1182 = vmatpush1.msra.mxu0 0.0
    %1183 = vmatprep.subr.mxu0 0.0
    %1184 = vmatpush1.msra.mxu0 0.0
    %1185 = vmatprep.subr.mxu0 0.0
    %1186 = vmatpush1.msra.mxu0 0.0
    %1187 = vmatprep.subr.mxu0 0.0
    %1188 = vmatpush1.msra.mxu0 0.0
    %1189 = vmatprep.subr.mxu0 0.0
    %1190 = vmatpush1.msra.mxu0 0.0
    %1191 = vmatprep.mubr.f32.mxu0 0.0
    %1192 = vmatmul.mubr.f32.gmra.mrb[0].mxu0 %v1125
    %v1193 = vpop.f32.mrb[0].mxu0
    %v1194 = vadd.f32 %v215, %v1193
    %v1195 = vpop.f32.mrb[0].mxu0
    %1196 = vdwg.mxu0
    %v1197 = vmul.f32 %v1194, %v222
    %v1198 = vtanh.pop %v1197
    %v1199 = vmul.f32 %v1198, 0.5
    %v1200 = vadd.f32 %v1199, 0.5
    %v1201 = vsel %vm221, %v1198, %v1200
    %v1202 = vmul.f32 %v1201, %v1013
    %1204 = vrot.lane.b32.xlu0 %v1201, 64
    %v1205 = vpop.permute.xlu0 %1204
    %v1207 = vmul.f32 %v1201, %v1205
    %1209 = vrot.lane.b32.xlu0 %v1207, 32
    %v1210 = vpop.permute.xlu0 %1209
    %v1212 = vadd.f32 %v1202, %v1210
    %v1213 = vtanh.pop %v1212
    %1215 = vrot.lane.b32.xlu0 %v1213, 64
    %v1216 = vpop.permute.xlu0 %1215
    %v1218 = vmul.f32 %v1201, %v1216
    %v1219 = vsel %vm68, %v1117, 0
    %1221 = vmatprep.subr.mxu0 0.0
    %1222 = vmatpush1.msra.mxu0 %v198
    %1223 = vmatprep.subr.mxu0 0.0
    %1224 = vmatpush1.msra.mxu0 %v199
    %1225 = vmatprep.subr.mxu0 0.0
    %1226 = vmatpush1.msra.mxu0 %v200
    %1227 = vmatprep.subr.mxu0 0.0
    %1228 = vmatpush1.msra.mxu0 %v201
    %1229 = vmatprep.subr.mxu0 0.0
    %1230 = vmatpush1.msra.mxu0 0.0
    %1231 = vmatprep.subr.mxu0 0.0
    %1232 = vmatpush1.msra.mxu0 0.0
    %1233 = vmatprep.subr.mxu0 0.0
    %1234 = vmatpush1.msra.mxu0 0.0
    %1235 = vmatprep.subr.mxu0 0.0
    %1236 = vmatpush1.msra.mxu0 0.0
    %1237 = vmatprep.subr.mxu0 0.0
    %1238 = vmatpush1.msra.mxu0 0.0
    %1239 = vmatprep.subr.mxu0 0.0
    %1240 = vmatpush1.msra.mxu0 0.0
    %1241 = vmatprep.subr.mxu0 0.0
    %1242 = vmatpush1.msra.mxu0 0.0
    %1243 = vmatprep.subr.mxu0 0.0
    %1244 = vmatpush1.msra.mxu0 0.0
    %1245 = vmatprep.subr.mxu0 0.0
    %1246 = vmatpush1.msra.mxu0 0.0
    %1247 = vmatprep.subr.mxu0 0.0
    %1248 = vmatpush1.msra.mxu0 0.0
    %1249 = vmatprep.subr.mxu0 0.0
    %1250 = vmatpush1.msra.mxu0 0.0
    %1251 = vmatprep.subr.mxu0 0.0
    %1252 = vmatpush1.msra.mxu0 0.0
    %1253 = vmatprep.subr.mxu0 0.0
    %1254 = vmatpush1.msra.mxu0 0.0
    %1255 = vmatprep.subr.mxu0 0.0
    %1256 = vmatpush1.msra.mxu0 0.0
    %1257 = vmatprep.subr.mxu0 0.0
    %1258 = vmatpush1.msra.mxu0 0.0
    %1259 = vmatprep.subr.mxu0 0.0
    %1260 = vmatpush1.msra.mxu0 0.0
    %1261 = vmatprep.subr.mxu0 0.0
    %1262 = vmatpush1.msra.mxu0 0.0
    %1263 = vmatprep.subr.mxu0 0.0
    %1264 = vmatpush1.msra.mxu0 0.0
    %1265 = vmatprep.subr.mxu0 0.0
    %1266 = vmatpush1.msra.mxu0 0.0
    %1267 = vmatprep.subr.mxu0 0.0
    %1268 = vmatpush1.msra.mxu0 0.0
    %1269 = vmatprep.subr.mxu0 0.0
    %1270 = vmatpush1.msra.mxu0 0.0
    %1271 = vmatprep.subr.mxu0 0.0
    %1272 = vmatpush1.msra.mxu0 0.0
    %1273 = vmatprep.subr.mxu0 0.0
    %1274 = vmatpush1.msra.mxu0 0.0
    %1275 = vmatprep.subr.mxu0 0.0
    %1276 = vmatpush1.msra.mxu0 0.0
    %1277 = vmatprep.subr.mxu0 0.0
    %1278 = vmatpush1.msra.mxu0 0.0
    %1279 = vmatprep.subr.mxu0 0.0
    %1280 = vmatpush1.msra.mxu0 0.0
    %1281 = vmatprep.subr.mxu0 0.0
    %1282 = vmatpush1.msra.mxu0 0.0
    %1283 = vmatprep.subr.mxu0 0.0
    %1284 = vmatpush1.msra.mxu0 0.0
    %1285 = vmatprep.mubr.f32.mxu0 0.0
    %1286 = vmatmul.mubr.f32.gmra.mrb[0].mxu0 %v1219
    %v1287 = vpop.f32.mrb[0].mxu0
    %v1288 = vadd.f32 0.0, %v1287
    %v1289 = vpop.f32.mrb[0].mxu0
    %1290 = vdwg.mxu0
    %v1291 = vadd.f32 %v185, %v1288
    %v1292 = vmul.f32 %v1291, %v222
    %v1293 = vtanh.pop %v1292
    %v1294 = vmul.f32 %v1293, 0.5
    %v1295 = vadd.f32 %v1294, 0.5
    %v1296 = vsel %vm221, %v1293, %v1295
    %v1297 = vmul.f32 %v1296, %v1108
    %1299 = vrot.lane.b32.xlu0 %v1296, 64
    %v1300 = vpop.permute.xlu0 %1299
    %v1302 = vmul.f32 %v1296, %v1300
    %1304 = vrot.lane.b32.xlu0 %v1302, 32
    %v1305 = vpop.permute.xlu0 %1304
    %v1307 = vadd.f32 %v1297, %v1305
    %v1308 = vtanh.pop %v1307
    %1310 = vrot.lane.b32.xlu0 %v1308, 64
    %v1311 = vpop.permute.xlu0 %1310
    %v1313 = vmul.f32 %v1296, %v1311
    %1315 = vrot.lane.b32.xlu0 %v1313, 32
    %v1316 = vpop.permute.xlu0 %1315
    %1319 = vrot.lane.b32.xlu0 %v1218, 64
    %v1320 = vpop.permute.xlu0 %1319
    %v1322 = vsel %vm68, %v1316, %v1320
    %v1324 = vsel %vm327, %v1322, 0
    %1326 = vmatprep.subr.mxu0 0.0
    %1327 = vmatpush1.msra.mxu0 %v202
    %1328 = vmatprep.subr.mxu0 0.0
    %1329 = vmatpush1.msra.mxu0 %v203
    %1330 = vmatprep.subr.mxu0 0.0
    %1331 = vmatpush1.msra.mxu0 %v204
    %1332 = vmatprep.subr.mxu0 0.0
    %1333 = vmatpush1.msra.mxu0 %v205
    %1334 = vmatprep.subr.mxu0 0.0
    %1335 = vmatpush1.msra.mxu0 %v206
    %1336 = vmatprep.subr.mxu0 0.0
    %1337 = vmatpush1.msra.mxu0 %v207
    %1338 = vmatprep.subr.mxu0 0.0
    %1339 = vmatpush1.msra.mxu0 %v208
    %1340 = vmatprep.subr.mxu0 0.0
    %1341 = vmatpush1.msra.mxu0 %v209
    %1342 = vmatprep.subr.mxu0 0.0
    %1343 = vmatpush1.msra.mxu0 0.0
    %1344 = vmatprep.subr.mxu0 0.0
    %1345 = vmatpush1.msra.mxu0 0.0
    %1346 = vmatprep.subr.mxu0 0.0
    %1347 = vmatpush1.msra.mxu0 0.0
    %1348 = vmatprep.subr.mxu0 0.0
    %1349 = vmatpush1.msra.mxu0 0.0
    %1350 = vmatprep.subr.mxu0 0.0
    %1351 = vmatpush1.msra.mxu0 0.0
    %1352 = vmatprep.subr.mxu0 0.0
    %1353 = vmatpush1.msra.mxu0 0.0
    %1354 = vmatprep.subr.mxu0 0.0
    %1355 = vmatpush1.msra.mxu0 0.0
    %1356 = vmatprep.subr.mxu0 0.0
    %1357 = vmatpush1.msra.mxu0 0.0
    %1358 = vmatprep.subr.mxu0 0.0
    %1359 = vmatpush1.msra.mxu0 0.0
    %1360 = vmatprep.subr.mxu0 0.0
    %1361 = vmatpush1.msra.mxu0 0.0
    %1362 = vmatprep.subr.mxu0 0.0
    %1363 = vmatpush1.msra.mxu0 0.0
    %1364 = vmatprep.subr.mxu0 0.0
    %1365 = vmatpush1.msra.mxu0 0.0
    %1366 = vmatprep.subr.mxu0 0.0
    %1367 = vmatpush1.msra.mxu0 0.0
    %1368 = vmatprep.subr.mxu0 0.0
    %1369 = vmatpush1.msra.mxu0 0.0
    %1370 = vmatprep.subr.mxu0 0.0
    %1371 = vmatpush1.msra.mxu0 0.0
    %1372 = vmatprep.subr.mxu0 0.0
    %1373 = vmatpush1.msra.mxu0 0.0
    %1374 = vmatprep.subr.mxu0 0.0
    %1375 = vmatpush1.msra.mxu0 0.0
    %1376 = vmatprep.subr.mxu0 0.0
    %1377 = vmatpush1.msra.mxu0 0.0
    %1378 = vmatprep.subr.mxu0 0.0
    %1379 = vmatpush1.msra.mxu0 0.0
    %1380 = vmatprep.subr.mxu0 0.0
    %1381 = vmatpush1.msra.mxu0 0.0
    %1382 = vmatprep.subr.mxu0 0.0
    %1383 = vmatpush1.msra.mxu0 0.0
    %1384 = vmatprep.subr.mxu0 0.0
    %1385 = vmatpush1.msra.mxu0 0.0
    %1386 = vmatprep.subr.mxu0 0.0
    %1387 = vmatpush1.msra.mxu0 0.0
    %1388 = vmatprep.subr.mxu0 0.0
    %1389 = vmatpush1.msra.mxu0 0.0
    %1390 = vmatprep.mubr.f32.mxu0 0.0
    %1391 = vmatmul.mubr.f32.gmra.mrb[0].mxu0 %v1324
    %v1392 = vpop.f32.mrb[0].mxu0
    %v1393 = vadd.f32 %v215, %v1392
    %v1394 = vpop.f32.mrb[0].mxu0
    %1395 = vdwg.mxu0
    %v1396 = vmul.f32 %v1393, %v222
    %v1397 = vtanh.pop %v1396
    %v1398 = vmul.f32 %v1397, 0.5
    %v1399 = vadd.f32 %v1398, 0.5
    %v1400 = vsel %vm221, %v1397, %v1399
    %v1401 = vmul.f32 %v1400, %v1212
    %1403 = vrot.lane.b32.xlu0 %v1400, 64
    %v1404 = vpop.permute.xlu0 %1403
    %v1406 = vmul.f32 %v1400, %v1404
    %1408 = vrot.lane.b32.xlu0 %v1406, 32
    %v1409 = vpop.permute.xlu0 %1408
    %v1411 = vadd.f32 %v1401, %v1409
    %v1412 = vtanh.pop %v1411
    %1414 = vrot.lane.b32.xlu0 %v1412, 64
    %v1415 = vpop.permute.xlu0 %1414
    %v1417 = vmul.f32 %v1400, %v1415
    %v1418 = vsel %vm68, %v1316, 0
    %1420 = vmatprep.subr.mxu0 0.0
    %1421 = vmatpush1.msra.mxu0 %v198
    %1422 = vmatprep.subr.mxu0 0.0
    %1423 = vmatpush1.msra.mxu0 %v199
    %1424 = vmatprep.subr.mxu0 0.0
    %1425 = vmatpush1.msra.mxu0 %v200
    %1426 = vmatprep.subr.mxu0 0.0
    %1427 = vmatpush1.msra.mxu0 %v201
    %1428 = vmatprep.subr.mxu0 0.0
    %1429 = vmatpush1.msra.mxu0 0.0
    %1430 = vmatprep.subr.mxu0 0.0
    %1431 = vmatpush1.msra.mxu0 0.0
    %1432 = vmatprep.subr.mxu0 0.0
    %1433 = vmatpush1.msra.mxu0 0.0
    %1434 = vmatprep.subr.mxu0 0.0
    %1435 = vmatpush1.msra.mxu0 0.0
    %1436 = vmatprep.subr.mxu0 0.0
    %1437 = vmatpush1.msra.mxu0 0.0
    %1438 = vmatprep.subr.mxu0 0.0
    %1439 = vmatpush1.msra.mxu0 0.0
    %1440 = vmatprep.subr.mxu0 0.0
    %1441 = vmatpush1.msra.mxu0 0.0
    %1442 = vmatprep.subr.mxu0 0.0
    %1443 = vmatpush1.msra.mxu0 0.0
    %1444 = vmatprep.subr.mxu0 0.0
    %1445 = vmatpush1.msra.mxu0 0.0
    %1446 = vmatprep.subr.mxu0 0.0
    %1447 = vmatpush1.msra.mxu0 0.0
    %1448 = vmatprep.subr.mxu0 0.0
    %1449 = vmatpush1.msra.mxu0 0.0
    %1450 = vmatprep.subr.mxu0 0.0
    %1451 = vmatpush1.msra.mxu0 0.0
    %1452 = vmatprep.subr.mxu0 0.0
    %1453 = vmatpush1.msra.mxu0 0.0
    %1454 = vmatprep.subr.mxu0 0.0
    %1455 = vmatpush1.msra.mxu0 0.0
    %1456 = vmatprep.subr.mxu0 0.0
    %1457 = vmatpush1.msra.mxu0 0.0
    %1458 = vmatprep.subr.mxu0 0.0
    %1459 = vmatpush1.msra.mxu0 0.0
    %1460 = vmatprep.subr.mxu0 0.0
    %1461 = vmatpush1.msra.mxu0 0.0
    %1462 = vmatprep.subr.mxu0 0.0
    %1463 = vmatpush1.msra.mxu0 0.0
    %1464 = vmatprep.subr.mxu0 0.0
    %1465 = vmatpush1.msra.mxu0 0.0
    %1466 = vmatprep.subr.mxu0 0.0
    %1467 = vmatpush1.msra.mxu0 0.0
    %1468 = vmatprep.subr.mxu0 0.0
    %1469 = vmatpush1.msra.mxu0 0.0
    %1470 = vmatprep.subr.mxu0 0.0
    %1471 = vmatpush1.msra.mxu0 0.0
    %1472 = vmatprep.subr.mxu0 0.0
    %1473 = vmatpush1.msra.mxu0 0.0
    %1474 = vmatprep.subr.mxu0 0.0
    %1475 = vmatpush1.msra.mxu0 0.0
    %1476 = vmatprep.subr.mxu0 0.0
    %1477 = vmatpush1.msra.mxu0 0.0
    %1478 = vmatprep.subr.mxu0 0.0
    %1479 = vmatpush1.msra.mxu0 0.0
    %1480 = vmatprep.subr.mxu0 0.0
    %1481 = vmatpush1.msra.mxu0 0.0
    %1482 = vmatprep.subr.mxu0 0.0
    %1483 = vmatpush1.msra.mxu0 0.0
    %1484 = vmatprep.mubr.f32.mxu0 0.0
    %1485 = vmatmul.mubr.f32.gmra.mrb[0].mxu0 %v1418
    %v1486 = vpop.f32.mrb[0].mxu0
    %v1487 = vadd.f32 0.0, %v1486
    %v1488 = vpop.f32.mrb[0].mxu0
    %1489 = vdwg.mxu0
    %v1490 = vadd.f32 %v190, %v1487
    %v1491 = vmul.f32 %v1490, %v222
    %v1492 = vtanh.pop %v1491
    %v1493 = vmul.f32 %v1492, 0.5
    %v1494 = vadd.f32 %v1493, 0.5
    %v1495 = vsel %vm221, %v1492, %v1494
    %v1496 = vmul.f32 %v1495, %v1307
    %1498 = vrot.lane.b32.xlu0 %v1495, 64
    %v1499 = vpop.permute.xlu0 %1498
    %v1501 = vmul.f32 %v1495, %v1499
    %1503 = vrot.lane.b32.xlu0 %v1501, 32
    %v1504 = vpop.permute.xlu0 %1503
    %v1506 = vadd.f32 %v1496, %v1504
    %v1507 = vtanh.pop %v1506
    %1509 = vrot.lane.b32.xlu0 %v1507, 64
    %v1510 = vpop.permute.xlu0 %1509
    %v1512 = vmul.f32 %v1495, %v1510
    %1514 = vrot.lane.b32.xlu0 %v1512, 32
    %v1515 = vpop.permute.xlu0 %1514
    %1518 = vrot.lane.b32.xlu0 %v1417, 64
    %v1519 = vpop.permute.xlu0 %1518
    %v1521 = vsel %vm68, %v1515, %v1519
    %v1523 = vsel %vm327, %v1521, 0
    %1525 = vmatprep.subr.mxu0 0.0
    %1526 = vmatpush1.msra.mxu0 %v202
    %1527 = vmatprep.subr.mxu0 0.0
    %1528 = vmatpush1.msra.mxu0 %v203
    %1529 = vmatprep.subr.mxu0 0.0
    %1530 = vmatpush1.msra.mxu0 %v204
    %1531 = vmatprep.subr.mxu0 0.0
    %1532 = vmatpush1.msra.mxu0 %v205
    %1533 = vmatprep.subr.mxu0 0.0
    %1534 = vmatpush1.msra.mxu0 %v206
    %1535 = vmatprep.subr.mxu0 0.0
    %1536 = vmatpush1.msra.mxu0 %v207
    %1537 = vmatprep.subr.mxu0 0.0
    %1538 = vmatpush1.msra.mxu0 %v208
    %1539 = vmatprep.subr.mxu0 0.0
    %1540 = vmatpush1.msra.mxu0 %v209
    %1541 = vmatprep.subr.mxu0 0.0
    %1542 = vmatpush1.msra.mxu0 0.0
    %1543 = vmatprep.subr.mxu0 0.0
    %1544 = vmatpush1.msra.mxu0 0.0
    %1545 = vmatprep.subr.mxu0 0.0
    %1546 = vmatpush1.msra.mxu0 0.0
    %1547 = vmatprep.subr.mxu0 0.0
    %1548 = vmatpush1.msra.mxu0 0.0
    %1549 = vmatprep.subr.mxu0 0.0
    %1550 = vmatpush1.msra.mxu0 0.0
    %1551 = vmatprep.subr.mxu0 0.0
    %1552 = vmatpush1.msra.mxu0 0.0
    %1553 = vmatprep.subr.mxu0 0.0
    %1554 = vmatpush1.msra.mxu0 0.0
    %1555 = vmatprep.subr.mxu0 0.0
    %1556 = vmatpush1.msra.mxu0 0.0
    %1557 = vmatprep.subr.mxu0 0.0
    %1558 = vmatpush1.msra.mxu0 0.0
    %1559 = vmatprep.subr.mxu0 0.0
    %1560 = vmatpush1.msra.mxu0 0.0
    %1561 = vmatprep.subr.mxu0 0.0
    %1562 = vmatpush1.msra.mxu0 0.0
    %1563 = vmatprep.subr.mxu0 0.0
    %1564 = vmatpush1.msra.mxu0 0.0
    %1565 = vmatprep.subr.mxu0 0.0
    %1566 = vmatpush1.msra.mxu0 0.0
    %1567 = vmatprep.subr.mxu0 0.0
    %1568 = vmatpush1.msra.mxu0 0.0
    %1569 = vmatprep.subr.mxu0 0.0
    %1570 = vmatpush1.msra.mxu0 0.0
    %1571 = vmatprep.subr.mxu0 0.0
    %1572 = vmatpush1.msra.mxu0 0.0
    %1573 = vmatprep.subr.mxu0 0.0
    %1574 = vmatpush1.msra.mxu0 0.0
    %1575 = vmatprep.subr.mxu0 0.0
    %1576 = vmatpush1.msra.mxu0 0.0
    %1577 = vmatprep.subr.mxu0 0.0
    %1578 = vmatpush1.msra.mxu0 0.0
    %1579 = vmatprep.subr.mxu0 0.0
    %1580 = vmatpush1.msra.mxu0 0.0
    %1581 = vmatprep.subr.mxu0 0.0
    %1582 = vmatpush1.msra.mxu0 0.0
    %1583 = vmatprep.subr.mxu0 0.0
    %1584 = vmatpush1.msra.mxu0 0.0
    %1585 = vmatprep.subr.mxu0 0.0
    %1586 = vmatpush1.msra.mxu0 0.0
    %1587 = vmatprep.subr.mxu0 0.0
    %1588 = vmatpush1.msra.mxu0 0.0
    %1589 = vmatprep.mubr.f32.mxu0 0.0
    %1590 = vmatmul.mubr.f32.gmra.mrb[0].mxu0 %v1523
    %v1591 = vpop.f32.mrb[0].mxu0
    %v1592 = vadd.f32 %v215, %v1591
    %v1593 = vpop.f32.mrb[0].mxu0
    %1594 = vdwg.mxu0
    %v1595 = vmul.f32 %v1592, %v222
    %v1596 = vtanh.pop %v1595
    %v1597 = vmul.f32 %v1596, 0.5
    %v1598 = vadd.f32 %v1597, 0.5
    %v1599 = vsel %vm221, %v1596, %v1598
    %v1600 = vmul.f32 %v1599, %v1411
    %1602 = vrot.lane.b32.xlu0 %v1599, 64
    %v1603 = vpop.permute.xlu0 %1602
    %v1605 = vmul.f32 %v1599, %v1603
    %1607 = vrot.lane.b32.xlu0 %v1605, 32
    %v1608 = vpop.permute.xlu0 %1607
    %v1610 = vadd.f32 %v1600, %v1608
    %v1611 = vtanh.pop %v1610
    %1613 = vrot.lane.b32.xlu0 %v1611, 64
    %v1614 = vpop.permute.xlu0 %1613
    %v1616 = vmul.f32 %v1599, %v1614
    %v1617 = vsel %vm68, %v1515, 0
    %1619 = vmatprep.subr.mxu0 0.0
    %1620 = vmatpush1.msra.mxu0 %v198
    %1621 = vmatprep.subr.mxu0 0.0
    %1622 = vmatpush1.msra.mxu0 %v199
    %1623 = vmatprep.subr.mxu0 0.0
    %1624 = vmatpush1.msra.mxu0 %v200
    %1625 = vmatprep.subr.mxu0 0.0
    %1626 = vmatpush1.msra.mxu0 %v201
    %1627 = vmatprep.subr.mxu0 0.0
    %1628 = vmatpush1.msra.mxu0 0.0
    %1629 = vmatprep.subr.mxu0 0.0
    %1630 = vmatpush1.msra.mxu0 0.0
    %1631 = vmatprep.subr.mxu0 0.0
    %1632 = vmatpush1.msra.mxu0 0.0
    %1633 = vmatprep.subr.mxu0 0.0
    %1634 = vmatpush1.msra.mxu0 0.0
    %1635 = vmatprep.subr.mxu0 0.0
    %1636 = vmatpush1.msra.mxu0 0.0
    %1637 = vmatprep.subr.mxu0 0.0
    %1638 = vmatpush1.msra.mxu0 0.0
    %1639 = vmatprep.subr.mxu0 0.0
    %1640 = vmatpush1.msra.mxu0 0.0
    %1641 = vmatprep.subr.mxu0 0.0
    %1642 = vmatpush1.msra.mxu0 0.0
    %1643 = vmatprep.subr.mxu0 0.0
    %1644 = vmatpush1.msra.mxu0 0.0
    %1645 = vmatprep.subr.mxu0 0.0
    %1646 = vmatpush1.msra.mxu0 0.0
    %1647 = vmatprep.subr.mxu0 0.0
    %1648 = vmatpush1.msra.mxu0 0.0
    %1649 = vmatprep.subr.mxu0 0.0
    %1650 = vmatpush1.msra.mxu0 0.0
    %1651 = vmatprep.subr.mxu0 0.0
    %1652 = vmatpush1.msra.mxu0 0.0
    %1653 = vmatprep.subr.mxu0 0.0
    %1654 = vmatpush1.msra.mxu0 0.0
    %1655 = vmatprep.subr.mxu0 0.0
    %1656 = vmatpush1.msra.mxu0 0.0
    %1657 = vmatprep.subr.mxu0 0.0
    %1658 = vmatpush1.msra.mxu0 0.0
    %1659 = vmatprep.subr.mxu0 0.0
    %1660 = vmatpush1.msra.mxu0 0.0
    %1661 = vmatprep.subr.mxu0 0.0
    %1662 = vmatpush1.msra.mxu0 0.0
    %1663 = vmatprep.subr.mxu0 0.0
    %1664 = vmatpush1.msra.mxu0 0.0
    %1665 = vmatprep.subr.mxu0 0.0
    %1666 = vmatpush1.msra.mxu0 0.0
    %1667 = vmatprep.subr.mxu0 0.0
    %1668 = vmatpush1.msra.mxu0 0.0
    %1669 = vmatprep.subr.mxu0 0.0
    %1670 = vmatpush1.msra.mxu0 0.0
    %1671 = vmatprep.subr.mxu0 0.0
    %1672 = vmatpush1.msra.mxu0 0.0
    %1673 = vmatprep.subr.mxu0 0.0
    %1674 = vmatpush1.msra.mxu0 0.0
    %1675 = vmatprep.subr.mxu0 0.0
    %1676 = vmatpush1.msra.mxu0 0.0
    %1677 = vmatprep.subr.mxu0 0.0
    %1678 = vmatpush1.msra.mxu0 0.0
    %1679 = vmatprep.subr.mxu0 0.0
    %1680 = vmatpush1.msra.mxu0 0.0
    %1681 = vmatprep.subr.mxu0 0.0
    %1682 = vmatpush1.msra.mxu0 0.0
    %1683 = vmatprep.mubr.f32.mxu0 0.0
    %1684 = vmatmul.mubr.f32.gmra.mrb[0].mxu0 %v1617
    %v1685 = vpop.f32.mrb[0].mxu0
    %v1686 = vadd.f32 0.0, %v1685
    %v1687 = vpop.f32.mrb[0].mxu0
    %1688 = vdwg.mxu0
    %v1689 = vadd.f32 %v195, %v1686
    %v1690 = vmul.f32 %v1689, %v222
    %v1691 = vtanh.pop %v1690
    %v1692 = vmul.f32 %v1691, 0.5
    %v1693 = vadd.f32 %v1692, 0.5
    %v1694 = vsel %vm221, %v1691, %v1693
    %v1695 = vmul.f32 %v1694, %v1506
    %1697 = vrot.lane.b32.xlu0 %v1694, 64
    %v1698 = vpop.permute.xlu0 %1697
    %v1700 = vmul.f32 %v1694, %v1698
    %1702 = vrot.lane.b32.xlu0 %v1700, 32
    %v1703 = vpop.permute.xlu0 %1702
    %v1705 = vadd.f32 %v1695, %v1703
    %v1706 = vtanh.pop %v1705
    %1708 = vrot.lane.b32.xlu0 %v1706, 64
    %v1709 = vpop.permute.xlu0 %1708
    %v1711 = vmul.f32 %v1694, %v1709
    %1713 = vrot.lane.b32.xlu0 %v1711, 32
    %v1714 = vpop.permute.xlu0 %1713
    %1717 = vrot.lane.b32.xlu0 %v1616, 64
    %v1718 = vpop.permute.xlu0 %1717
    %v1720 = vsel %vm68, %v1714, %v1718
    %v1722 = vsel %vm327, %v1720, 0
    %1724 = vmatprep.subr.mxu0 0.0
    %1725 = vmatpush1.msra.mxu0 %v202
    %1726 = vmatprep.subr.mxu0 0.0
    %1727 = vmatpush1.msra.mxu0 %v203
    %1728 = vmatprep.subr.mxu0 0.0
    %1729 = vmatpush1.msra.mxu0 %v204
    %1730 = vmatprep.subr.mxu0 0.0
    %1731 = vmatpush1.msra.mxu0 %v205
    %1732 = vmatprep.subr.mxu0 0.0
    %1733 = vmatpush1.msra.mxu0 %v206
    %1734 = vmatprep.subr.mxu0 0.0
    %1735 = vmatpush1.msra.mxu0 %v207
    %1736 = vmatprep.subr.mxu0 0.0
    %1737 = vmatpush1.msra.mxu0 %v208
    %1738 = vmatprep.subr.mxu0 0.0
    %1739 = vmatpush1.msra.mxu0 %v209
    %1740 = vmatprep.subr.mxu0 0.0
    %1741 = vmatpush1.msra.mxu0 0.0
    %1742 = vmatprep.subr.mxu0 0.0
    %1743 = vmatpush1.msra.mxu0 0.0
    %1744 = vmatprep.subr.mxu0 0.0
    %1745 = vmatpush1.msra.mxu0 0.0
    %1746 = vmatprep.subr.mxu0 0.0
    %1747 = vmatpush1.msra.mxu0 0.0
    %1748 = vmatprep.subr.mxu0 0.0
    %1749 = vmatpush1.msra.mxu0 0.0
    %1750 = vmatprep.subr.mxu0 0.0
    %1751 = vmatpush1.msra.mxu0 0.0
    %1752 = vmatprep.subr.mxu0 0.0
    %1753 = vmatpush1.msra.mxu0 0.0
    %1754 = vmatprep.subr.mxu0 0.0
    %1755 = vmatpush1.msra.mxu0 0.0
    %1756 = vmatprep.subr.mxu0 0.0
    %1757 = vmatpush1.msra.mxu0 0.0
    %1758 = vmatprep.subr.mxu0 0.0
    %1759 = vmatpush1.msra.mxu0 0.0
    %1760 = vmatprep.subr.mxu0 0.0
    %1761 = vmatpush1.msra.mxu0 0.0
    %1762 = vmatprep.subr.mxu0 0.0
    %1763 = vmatpush1.msra.mxu0 0.0
    %1764 = vmatprep.subr.mxu0 0.0
    %1765 = vmatpush1.msra.mxu0 0.0
    %1766 = vmatprep.subr.mxu0 0.0
    %1767 = vmatpush1.msra.mxu0 0.0
    %1768 = vmatprep.subr.mxu0 0.0
    %1769 = vmatpush1.msra.mxu0 0.0
    %1770 = vmatprep.subr.mxu0 0.0
    %1771 = vmatpush1.msra.mxu0 0.0
    %1772 = vmatprep.subr.mxu0 0.0
    %1773 = vmatpush1.msra.mxu0 0.0
    %1774 = vmatprep.subr.mxu0 0.0
    %1775 = vmatpush1.msra.mxu0 0.0
    %1776 = vmatprep.subr.mxu0 0.0
    %1777 = vmatpush1.msra.mxu0 0.0
    %1778 = vmatprep.subr.mxu0 0.0
    %1779 = vmatpush1.msra.mxu0 0.0
    %1780 = vmatprep.subr.mxu0 0.0
    %1781 = vmatpush1.msra.mxu0 0.0
    %1782 = vmatprep.subr.mxu0 0.0
    %1783 = vmatpush1.msra.mxu0 0.0
    %1784 = vmatprep.subr.mxu0 0.0
    %1785 = vmatpush1.msra.mxu0 0.0
    %1786 = vmatprep.subr.mxu0 0.0
    %1787 = vmatpush1.msra.mxu0 0.0
    %1788 = vmatprep.mubr.f32.mxu0 0.0
    %1789 = vmatmul.mubr.f32.gmra.mrb[0].mxu0 %v1722
    %v1790 = vpop.f32.mrb[0].mxu0
    %v1791 = vadd.f32 %v215, %v1790
    %v1792 = vpop.f32.mrb[0].mxu0
    %1793 = vdwg.mxu0
    %v1794 = vmul.f32 %v1791, %v222
    %v1795 = vtanh.pop %v1794
    %v1796 = vmul.f32 %v1795, 0.5
    %v1797 = vadd.f32 %v1796, 0.5
    %v1798 = vsel %vm221, %v1795, %v1797
    %v1799 = vmul.f32 %v1798, %v1610
    %1801 = vrot.lane.b32.xlu0 %v1798, 64
    %v1802 = vpop.permute.xlu0 %1801
    %v1804 = vmul.f32 %v1798, %v1802
    %1806 = vrot.lane.b32.xlu0 %v1804, 32
    %v1807 = vpop.permute.xlu0 %1806
    %v1809 = vadd.f32 %v1799, %v1807
    %v1810 = vtanh.pop %v1809
    %1812 = vrot.lane.b32.xlu0 %v1810, 64
    %v1813 = vpop.permute.xlu0 %1812
    %v1815 = vmul.f32 %v1798, %v1813
    %v1816 = vld [vmem:[%s7] sm:$0x1]
    %v1818 = vlaneseq
    %v1819 = vshrl.u32 %v1818, 7
    %v1820 = vsub.s32 0, %v1819
    %v1821 = vrot.slane %v1816, %v1820
    %1822 = vrot.lane.b32.xlu0 %v1821, 96
    %v1823 = vpop.permute.xlu0 %1822
    %v1825 = vmul.f32 %v1815, %v1823
    %1827 = vrot.lane.b32.xlu0 %v1825, 32
    %v1828 = vpop.permute.xlu0 %1827
    %v1830 = vsel %vm68, %v1828, 0.0
    %1831 = vadd.xlane.f32.xlu0 %v1830
    %v1832 = vpop.xlane.xlu0 %1831
    %v1833 = vld [vmem:[#allocation2] sm:$0x1]
    %v1835 = vlaneseq
    %v1836 = vshrl.u32 %v1835, 7
    %v1837 = vsub.s32 0, %v1836
    %v1838 = vrot.slane %v1833, %v1837
    %v1840 = vadd.f32 %v1832, %v1838
    %vm1841 = vcmask 7168
    %1842 = vst.msk [vmem:[%s9] sm:$0xff] %vm1841, %v1840
    // Predicated region
    $region42: #{tpu_custom_call.1} parent=1 // pred_check
      _
    $region43: #{tpu_custom_call.1} parent=1 // pred_check_branch
      %1844 = sbr.rel (0) target = $region45
    $region44: #{tpu_custom_call.1} parent=1 // pred_region
      _
    $region45: #{tpu_custom_call.1} parent=1 // pred_fallthru
      _
    // Predicated region
    $region46: #{tpu_custom_call.1} parent=1 // pred_check
      _
    $region47: #{tpu_custom_call.1} parent=1 // pred_check_branch
      %1846 = sbr.rel (0) target = $region49
    $region48: #{tpu_custom_call.1} parent=1 // pred_region
      _
    $region49: #{tpu_custom_call.1} parent=1 // pred_fallthru
      _
    %1847 = vsyncpa [#allocation4], 1

</llo_original>
